<compile_context>
chip_gen: v6e
topology: v6e:2x2x1
jax: 0.10.0
libtpu: 0.0.40
codegen_flags: <defaults>
</compile_context>

<pallas_src>
import functools

import jax
import jax.numpy as jnp
from jax.experimental import pallas as pl
from jax.experimental.pallas import tpu as pltpu


# ----------------------------------------------------------------------------
# Kernel 1: (optional fused BN+ReLU prologue) -> 3x3 conv as one K-merged
#           matmul -> y (compute dtype) + lane-dense per-step sum / sum-sq.
# ----------------------------------------------------------------------------
def _conv_bn_stats_kernel(*refs, nchw_input, apply_prologue, block_n, H, W,
                          cin, cout, compute_dtype):
    if apply_prologue:
        x_ref, scale_ref, shift_ref, wband_ref, y_ref, stats_ref, m_ref = refs
    else:
        x_ref, wband_ref, y_ref, stats_ref, m_ref = refs
        scale_ref = shift_ref = None

    K1 = cin * W  # K extent of one kh tap (channel-major lanes: ci*W + wi)

    # Build the kh-merged LHS:
    #   M[e*H + h, kh*K1 + ci*W + wi] = x_e[h + kh - 1, ci, wi]  (0 outside H).
    # Zero padding along W is folded into the banded weight; zero padding
    # along H is the two explicitly re-zeroed row segments per element below
    # (re-zeroed every step -> no reliance on scratch persistence, safe under
    # megacore "parallel" splitting).
    for e in range(block_n):
        r0 = e * H
        if nchw_input:
            # Raw NCHW block -> channel-major lanes in-kernel (replaces the
            # wrapper-side XLA transpose pass).
            xe = jnp.concatenate([x_ref[e, ci] for ci in range(cin)], axis=1)
            xe = xe.astype(jnp.float32)                        # (H, K1)
        else:
            xe = x_ref[e].astype(jnp.float32)                  # (H, K1)
        if apply_prologue:
            # Previous layer's folded BatchNorm + ReLU: one FMA + max, f32.
            xe = jnp.maximum(xe * scale_ref[...] + shift_ref[...], 0.0)
        xe = xe.astype(compute_dtype)

        m_ref[r0:r0 + H, K1:2 * K1] = xe                                  # kh=1
        m_ref[r0 + 1:r0 + H, 0:K1] = xe[:H - 1]                           # kh=0
        m_ref[r0:r0 + H - 1, 2 * K1:3 * K1] = xe[1:]                      # kh=2
        m_ref[r0:r0 + 1, 0:K1] = jnp.zeros((1, K1), compute_dtype)        # halo
        m_ref[r0 + H - 1:r0 + H, 2 * K1:3 * K1] = jnp.zeros((1, K1),
                                                            compute_dtype)

    # Single K-merged matmul: (block_n*H, 3*K1) @ (3*K1, cout*W), f32 acc.
    acc = jnp.dot(m_ref[...], wband_ref[...],
                  preferred_element_type=jnp.float32)

    for e in range(block_n):
        y_ref[e] = acc[e * H:(e + 1) * H].astype(y_ref.dtype)

    # Lane-dense per-step stats (last dim = cout*W >= 128); the W-fold to
    # per-channel values happens in the wrapper.  Stats come from the f32
    # accumulator even when y is stored bf16 (intentional, documented).
    s = jnp.sum(acc, axis=0, keepdims=True)                    # (1, cout*W)
    ss = jnp.sum(acc * acc, axis=0, keepdims=True)             # (1, cout*W)
    stats_ref[0] = jnp.concatenate([s, ss], axis=0)


def conv3x3_bn_stats(x, wband, *, cin, cout, H, W, block_n,
                     scale=None, shift=None, nchw_input=False,
                     compute_dtype=jnp.bfloat16):
    """Bias-free 3x3 'same' conv + per-step BN statistics of its raw output.

    If scale/shift are given, relu(x*scale + shift) (the previous layer's
    folded BatchNorm) is applied as an in-kernel prologue.
    Returns (y (N, H, cout*W) compute_dtype, stats (steps, 2, cout*W) f32).
    """
    N = x.shape[0]
    assert N % block_n == 0
    steps = N // block_n
    K1 = cin * W
    apply_prologue = scale is not None

    in_specs = []
    args = []
    if nchw_input:
        in_specs.append(pl.BlockSpec((block_n, cin, H, W),
                                     lambda n: (n, 0, 0, 0)))
    else:
        in_specs.append(pl.BlockSpec((block_n, H, K1), lambda n: (n, 0, 0)))
    args.append(x)
    if apply_prologue:
        in_specs += [pl.BlockSpec((1, K1), lambda n: (0, 0)),
                     pl.BlockSpec((1, K1), lambda n: (0, 0))]
        args += [scale, shift]
    in_specs.append(pl.BlockSpec((3 * K1, cout * W), lambda n: (0, 0)))
    args.append(wband)

    kernel = functools.partial(
        _conv_bn_stats_kernel, nchw_input=nchw_input,
        apply_prologue=apply_prologue, block_n=block_n, H=H, W=W,
        cin=cin, cout=cout, compute_dtype=compute_dtype)

    return pl.pallas_call(
        kernel,
        out_shape=(jax.ShapeDtypeStruct((N, H, cout * W), compute_dtype),
                   jax.ShapeDtypeStruct((steps, 2, cout * W), jnp.float32)),
        grid_spec=pltpu.PrefetchScalarGridSpec(
            num_scalar_prefetch=0,
            grid=(steps,),
            in_specs=in_specs,
            out_specs=[pl.BlockSpec((block_n, H, cout * W),
                                    lambda n: (n, 0, 0)),
                       pl.BlockSpec((1, 2, cout * W), lambda n: (n, 0, 0))],
            scratch_shapes=[pltpu.VMEM((block_n * H, 3 * K1), compute_dtype)],
        ),
        compiler_params=pltpu.CompilerParams(
            dimension_semantics=("parallel",)),
    )(*args)


# ----------------------------------------------------------------------------
# Kernel 2: final folded BatchNorm + ReLU, fused with the NCHW output relayout
# (no separate XLA transpose pass, no extra elementwise HBM round trip).
# ----------------------------------------------------------------------------
def _bn_relu_nchw_kernel(y_ref, scale_ref, shift_ref, o_ref, *, block_n, H, W,
                         cout):
    for e in range(block_n):
        z = jnp.maximum(
            y_ref[e].astype(jnp.float32) * scale_ref[...] + shift_ref[...],
            0.0)                                                 # (H, cout*W)
        for co in range(cout):
            o_ref[e, co] = z[:, co * W:(co + 1) * W].astype(o_ref.dtype)


def bn_relu_to_nchw(y, scale, shift, *, cout, H, W, block_n):
    N = y.shape[0]
    steps = N // block_n
    return pl.pallas_call(
        functools.partial(_bn_relu_nchw_kernel, block_n=block_n, H=H, W=W,
                          cout=cout),
        out_shape=jax.ShapeDtypeStruct((N, cout, H, W), jnp.float32),
        grid_spec=pltpu.PrefetchScalarGridSpec(
            num_scalar_prefetch=0,
            grid=(steps,),
            in_specs=[pl.BlockSpec((block_n, H, cout * W),
                                   lambda n: (n, 0, 0)),
                      pl.BlockSpec((1, cout * W), lambda n: (0, 0)),
                      pl.BlockSpec((1, cout * W), lambda n: (0, 0))],
            out_specs=pl.BlockSpec((block_n, cout, H, W),
                                   lambda n: (n, 0, 0, 0)),
        ),
        compiler_params=pltpu.CompilerParams(
            dimension_semantics=("parallel",)),
    )(y, scale, shift)


# ----------------------------------------------------------------------------
# Wrapper-side helpers.
# ----------------------------------------------------------------------------
def _make_banded_weight(w_hwio, W, dtype):
    """(3,3,Cin,Cout) HWIO weight -> (3*Cin*W, Cout*W) kw-folded band.

    band[kh*Cin*W + ci*W + wi, co*W + wo] = w[kh, wi-wo+1, ci, co] if
    |wi - wo| <= 1 else 0, so (merged_LHS @ band) performs the kw/Cin
    contraction with the conv's zero padding along W built in.
    """
    _, _, cin, cout = w_hwio.shape
    wi = jnp.arange(W)[:, None, None]
    wo = jnp.arange(W)[None, :, None]
    kw = jnp.arange(3)[None, None, :]
    onehot = (wi - wo + 1 == kw).astype(w_hwio.dtype)          # (W, W, 3)
    band = jnp.einsum("iok,hkcd->hcido", onehot, w_hwio)       # (3,Cin,W,Cout,W)
    return band.reshape(3 * cin * W, cout * W).astype(dtype)


def _bn_affine(stats, count, gamma, beta, eps, cout, W):
    """Fold training-mode BatchNorm into per-channel (scale, shift).

    stats: (steps, 2, cout*W) lane-dense per-step [sum; sumsq].
    TODO(synk): switch to two-pass / Welford when count or activation
    magnitudes grow enough for E[x^2]-mean^2 cancellation to matter.
    """
    total = jnp.sum(stats, axis=0).reshape(2, cout, W).sum(axis=-1)  # (2, C)
    mean = total[0] / count
    var = jnp.maximum(total[1] / count - mean * mean, 0.0)           # biased
    scale = gamma * jax.lax.rsqrt(var + eps)
    return scale, beta - mean * scale


def _per_lane(v, W):
    """(C,) per-channel vector -> (1, C*W) matching channel-major lanes."""
    return jnp.repeat(v, W).reshape(1, v.shape[0] * W)


def _choose_block_n(N, H):
    """Batch elements per grid step: aim for >= 128 matmul rows per step."""
    target = max(1, 128 // max(H, 1))
    best = 1
    for d in range(1, N + 1):
        if N % d == 0 and d <= target:
            best = d
    return best


def prepare_params(params, W, compute_dtype=jnp.bfloat16):
    """Weight-dependent precomputation, hoisted out of the per-step forward
    (rebuild only when the weights change)."""
    return {
        "band1": _make_banded_weight(params["w1"], W, compute_dtype),
        "band2": _make_banded_weight(params["w2"], W, compute_dtype),
        "g1": params["g1"], "beta1": params["beta1"],
        "g2": params["g2"], "beta2": params["beta2"],
    }


# ----------------------------------------------------------------------------
# DoubleConv2d forward (NCHW in, NCHW out; no XLA relayout passes).
# ----------------------------------------------------------------------------
def double_conv2d(x_nchw, prepped, eps=1e-5, compute_dtype=jnp.bfloat16):
    N, Cin, H, W = x_nchw.shape
    band1, band2 = prepped["band1"], prepped["band2"]
    Cout = band1.shape[-1] // W
    block_n = _choose_block_n(N, H)
    count = N * H * W

    # Conv biases are intentionally NOT applied: a per-channel constant before
    # a training-mode BatchNorm is cancelled exactly by the batch-mean
    # subtraction (output unchanged).
    y1, st1 = conv3x3_bn_stats(
        x_nchw, band1, cin=Cin, cout=Cout, H=H, W=W, block_n=block_n,
        nchw_input=True, compute_dtype=compute_dtype)
    s1, t1 = _bn_affine(st1, count, prepped["g1"], prepped["beta1"], eps,
                        Cout, W)

    # BN1 + ReLU fused as the prologue of the conv2 kernel.
    y2, st2 = conv3x3_bn_stats(
        y1, band2, cin=Cout, cout=Cout, H=H, W=W, block_n=block_n,
        scale=_per_lane(s1, W), shift=_per_lane(t1, W),
        compute_dtype=compute_dtype)
    s2, t2 = _bn_affine(st2, count, prepped["g2"], prepped["beta2"], eps,
                        Cout, W)

    # Final BN2 + ReLU fused with the NCHW writeback.
    return bn_relu_to_nchw(y2, _per_lane(s2, W), _per_lane(t2, W),
                           cout=Cout, H=H, W=W, block_n=block_n)


# ----------------------------------------------------------------------------
# Pure-JAX reference (with conv bias, f32, highest precision) for verification.
# ----------------------------------------------------------------------------
def double_conv2d_ref(x_nchw, params, eps=1e-5):
    def conv(x, w, b):
        y = jax.lax.conv_general_dilated(
            x, w, window_strides=(1, 1), padding=((1, 1), (1, 1)),
            dimension_numbers=("NHWC", "HWIO", "NHWC"),
            precision=jax.lax.Precision.HIGHEST)
        return y + b[None, None, None, :]

    def bnrelu(x, g, bt):
        mean = jnp.mean(x, axis=(0, 1, 2), keepdims=True)
        var = jnp.mean((x - mean) ** 2, axis=(0, 1, 2), keepdims=True)
        y = (x - mean) * jax.lax.rsqrt(var + eps) * g + bt
        return jnp.maximum(y, 0.0)

    x = jnp.transpose(x_nchw, (0, 2, 3, 1))
    out = bnrelu(conv(x, params["w1"], params["b1"]), params["g1"],
                 params["beta1"])
    out = bnrelu(conv(out, params["w2"], params["b2"]), params["g2"],
                 params["beta2"])
    return jnp.transpose(out, (0, 3, 1, 2))


def init_params(key, in_channels, out_channels):
    k1, k2, k3, k4 = jax.random.split(key, 4)
    scale1 = 1.0 / jnp.sqrt(in_channels * 9.0)
    scale2 = 1.0 / jnp.sqrt(out_channels * 9.0)
    return {
        # weights stored HWIO (3,3,Cin,Cout); biases kept for API parity but
        # mathematically redundant under train-mode BatchNorm.
        "w1": jax.random.uniform(k1, (3, 3, in_channels, out_channels),
                                 jnp.float32, -scale1, scale1),
        "b1": jax.random.uniform(k2, (out_channels,), jnp.float32,
                                 -scale1, scale1),
        "g1": jnp.ones((out_channels,), jnp.float32),
        "beta1": jnp.zeros((out_channels,), jnp.float32),
        "w2": jax.random.uniform(k3, (3, 3, out_channels, out_channels),
                                 jnp.float32, -scale2, scale2),
        "b2": jax.random.uniform(k4, (out_channels,), jnp.float32,
                                 -scale2, scale2),
        "g2": jnp.ones((out_channels,), jnp.float32),
        "beta2": jnp.zeros((out_channels,), jnp.float32),
    }


if __name__ == "__main__":
    key = jax.random.PRNGKey(0)
    kx, kp = jax.random.split(key)

    N, Cin, H, W = 2, 4, 16, 16
    Cout = 8
    x = jax.random.normal(kx, (N, Cin, H, W), jnp.float32)   # NCHW, like PyTorch
    params = init_params(kp, Cin, Cout)

    ref = double_conv2d_ref(x, params)

    # f32 MXU path: tight check of the kernel math (incl. dropped conv bias,
    # in-kernel NCHW relayouts, merged-K matmul, lane-dense stats).
    prep_f32 = prepare_params(params, W, jnp.float32)
    out_f32 = jax.jit(functools.partial(double_conv2d,
                                        compute_dtype=jnp.float32))(x, prep_f32)
    out_f32 = jax.block_until_ready(out_f32)
    assert out_f32.shape == (N, Cout, H, W)
    assert jnp.allclose(out_f32, ref, rtol=1e-3, atol=1e-3), "f32 mismatch"

    # bf16 path (default): bf16 MXU operands AND bf16 HBM intermediates,
    # f32 accumulation / BN math.
    prep_bf16 = prepare_params(params, W, jnp.bfloat16)
    out_bf16 = jax.jit(double_conv2d)(x, prep_bf16)
    out_bf16 = jax.block_until_ready(out_bf16)
    assert out_bf16.shape == (N, Cout, H, W)
    assert jnp.allclose(out_bf16, ref, rtol=5e-2, atol=5e-2), "bf16 mismatch"

    print("KERNEL_OK")
</pallas_src>

<mosaic_0001>
module attributes {stable_mosaic.version = 11 : i64} {
  func.func @_conv_bn_stats_kernel(%arg0: i32, %arg1: memref<2x4x16x16xf32, #tpu.memory_space<vmem>>, %arg2: memref<192x128xf32, #tpu.memory_space<vmem>>, %arg3: memref<2x16x128xf32, #tpu.memory_space<vmem>>, %arg4: memref<1x2x128xf32, #tpu.memory_space<vmem>>, %arg5: memref<32x192xf32, #tpu.memory_space<vmem>>) attributes {dimension_semantics = [#tpu.dimension_semantics<parallel>], iteration_bounds = array<i64: 1>, scalar_prefetch = 0 : i64, scratch_operands = 1 : i64, tpu.core_type = #tpu.core_type<tc>, window_params = [{transform_indices = @transform_0, window_bounds = array<i64: 2, 4, 16, 16>}, {pipeline_mode = #tpu.pipeline_mode<synchronous>, transform_indices = @transform_1, window_bounds = array<i64: 192, 128>}, {transform_indices = @transform_2, window_bounds = array<i64: 2, 16, 128>}, {transform_indices = @transform_3, window_bounds = array<i64: 1, 2, 128>}]} {
    %c0 = arith.constant 0 : index
    %c0_0 = arith.constant 0 : index
    %c0_1 = arith.constant 0 : index
    %c0_2 = arith.constant 0 : index
    %0 = vector.load %arg1[%c0, %c0_0, %c0_1, %c0_2] : memref<2x4x16x16xf32, #tpu.memory_space<vmem>>, vector<1x1x16x16xf32>
    %1 = vector.shape_cast %0 : vector<1x1x16x16xf32> to vector<16x16xf32>
    %c0_3 = arith.constant 0 : index
    %c1 = arith.constant 1 : index
    %c0_4 = arith.constant 0 : index
    %c0_5 = arith.constant 0 : index
    %2 = vector.load %arg1[%c0_3, %c1, %c0_4, %c0_5] : memref<2x4x16x16xf32, #tpu.memory_space<vmem>>, vector<1x1x16x16xf32>
    %3 = vector.shape_cast %2 : vector<1x1x16x16xf32> to vector<16x16xf32>
    %c0_6 = arith.constant 0 : index
    %c2 = arith.constant 2 : index
    %c0_7 = arith.constant 0 : index
    %c0_8 = arith.constant 0 : index
    %4 = vector.load %arg1[%c0_6, %c2, %c0_7, %c0_8] : memref<2x4x16x16xf32, #tpu.memory_space<vmem>>, vector<1x1x16x16xf32>
    %5 = vector.shape_cast %4 : vector<1x1x16x16xf32> to vector<16x16xf32>
    %c0_9 = arith.constant 0 : index
    %c3 = arith.constant 3 : index
    %c0_10 = arith.constant 0 : index
    %c0_11 = arith.constant 0 : index
    %6 = vector.load %arg1[%c0_9, %c3, %c0_10, %c0_11] : memref<2x4x16x16xf32, #tpu.memory_space<vmem>>, vector<1x1x16x16xf32>
    %7 = vector.shape_cast %6 : vector<1x1x16x16xf32> to vector<16x16xf32>
    %8 = tpu.concatenate %1, %3, %5, %7 in 1 : vector<16x16xf32>, vector<16x16xf32>, vector<16x16xf32>, vector<16x16xf32> -> vector<16x64xf32>
    %c0_12 = arith.constant 0 : index
    %c64 = arith.constant 64 : index
    %9 = vector.load %arg5[%c0_12, %c64] : memref<32x192xf32, #tpu.memory_space<vmem>>, vector<16x64xf32>
    tpu.vector_store %arg5[%c0_12, %c64], %8 {strides = array<i32>} : memref<32x192xf32, #tpu.memory_space<vmem>>, vector<16x64xf32>,
    %10 = vector.extract_strided_slice %8 {offsets = [0, 0], sizes = [15, 64], strides = [1, 1]} : vector<16x64xf32> to vector<15x64xf32>
    %c1_13 = arith.constant 1 : index
    %c0_14 = arith.constant 0 : index
    %11 = vector.load %arg5[%c1_13, %c0_14] : memref<32x192xf32, #tpu.memory_space<vmem>>, vector<15x64xf32>
    tpu.vector_store %arg5[%c1_13, %c0_14], %10 {strides = array<i32>} : memref<32x192xf32, #tpu.memory_space<vmem>>, vector<15x64xf32>,
    %12 = vector.extract_strided_slice %8 {offsets = [1, 0], sizes = [15, 64], strides = [1, 1]} : vector<16x64xf32> to vector<15x64xf32>
    %c0_15 = arith.constant 0 : index
    %c128 = arith.constant 128 : index
    %13 = vector.load %arg5[%c0_15, %c128] : memref<32x192xf32, #tpu.memory_space<vmem>>, vector<15x64xf32>
    tpu.vector_store %arg5[%c0_15, %c128], %12 {strides = array<i32>} : memref<32x192xf32, #tpu.memory_space<vmem>>, vector<15x64xf32>,
    %cst = arith.constant 0.000000e+00 : f32
    %14 = vector.broadcast %cst : f32 to vector<1x64xf32>
    %c0_16 = arith.constant 0 : index
    %c0_17 = arith.constant 0 : index
    %15 = vector.load %arg5[%c0_16, %c0_17] : memref<32x192xf32, #tpu.memory_space<vmem>>, vector<1x64xf32>
    tpu.vector_store %arg5[%c0_16, %c0_17], %14 {strides = array<i32>} : memref<32x192xf32, #tpu.memory_space<vmem>>, vector<1x64xf32>,
    %cst_18 = arith.constant 0.000000e+00 : f32
    %16 = vector.broadcast %cst_18 : f32 to vector<1x64xf32>
    %c15 = arith.constant 15 : index
    %c128_19 = arith.constant 128 : index
    %17 = vector.load %arg5[%c15, %c128_19] : memref<32x192xf32, #tpu.memory_space<vmem>>, vector<1x64xf32>
    tpu.vector_store %arg5[%c15, %c128_19], %16 {strides = array<i32>} : memref<32x192xf32, #tpu.memory_space<vmem>>, vector<1x64xf32>,
    %c1_20 = arith.constant 1 : index
    %c0_21 = arith.constant 0 : index
    %c0_22 = arith.constant 0 : index
    %c0_23 = arith.constant 0 : index
    %18 = vector.load %arg1[%c1_20, %c0_21, %c0_22, %c0_23] : memref<2x4x16x16xf32, #tpu.memory_space<vmem>>, vector<1x1x16x16xf32>
    %19 = vector.shape_cast %18 : vector<1x1x16x16xf32> to vector<16x16xf32>
    %c1_24 = arith.constant 1 : index
    %c1_25 = arith.constant 1 : index
    %c0_26 = arith.constant 0 : index
    %c0_27 = arith.constant 0 : index
    %20 = vector.load %arg1[%c1_24, %c1_25, %c0_26, %c0_27] : memref<2x4x16x16xf32, #tpu.memory_space<vmem>>, vector<1x1x16x16xf32>
    %21 = vector.shape_cast %20 : vector<1x1x16x16xf32> to vector<16x16xf32>
    %c1_28 = arith.constant 1 : index
    %c2_29 = arith.constant 2 : index
    %c0_30 = arith.constant 0 : index
    %c0_31 = arith.constant 0 : index
    %22 = vector.load %arg1[%c1_28, %c2_29, %c0_30, %c0_31] : memref<2x4x16x16xf32, #tpu.memory_space<vmem>>, vector<1x1x16x16xf32>
    %23 = vector.shape_cast %22 : vector<1x1x16x16xf32> to vector<16x16xf32>
    %c1_32 = arith.constant 1 : index
    %c3_33 = arith.constant 3 : index
    %c0_34 = arith.constant 0 : index
    %c0_35 = arith.constant 0 : index
    %24 = vector.load %arg1[%c1_32, %c3_33, %c0_34, %c0_35] : memref<2x4x16x16xf32, #tpu.memory_space<vmem>>, vector<1x1x16x16xf32>
    %25 = vector.shape_cast %24 : vector<1x1x16x16xf32> to vector<16x16xf32>
    %26 = tpu.concatenate %19, %21, %23, %25 in 1 : vector<16x16xf32>, vector<16x16xf32>, vector<16x16xf32>, vector<16x16xf32> -> vector<16x64xf32>
    %c16 = arith.constant 16 : index
    %c64_36 = arith.constant 64 : index
    %27 = vector.load %arg5[%c16, %c64_36] : memref<32x192xf32, #tpu.memory_space<vmem>>, vector<16x64xf32>
    tpu.vector_store %arg5[%c16, %c64_36], %26 {strides = array<i32>} : memref<32x192xf32, #tpu.memory_space<vmem>>, vector<16x64xf32>,
    %28 = vector.extract_strided_slice %26 {offsets = [0, 0], sizes = [15, 64], strides = [1, 1]} : vector<16x64xf32> to vector<15x64xf32>
    %c17 = arith.constant 17 : index
    %c0_37 = arith.constant 0 : index
    %29 = vector.load %arg5[%c17, %c0_37] : memref<32x192xf32, #tpu.memory_space<vmem>>, vector<15x64xf32>
    tpu.vector_store %arg5[%c17, %c0_37], %28 {strides = array<i32>} : memref<32x192xf32, #tpu.memory_space<vmem>>, vector<15x64xf32>,
    %30 = vector.extract_strided_slice %26 {offsets = [1, 0], sizes = [15, 64], strides = [1, 1]} : vector<16x64xf32> to vector<15x64xf32>
    %c16_38 = arith.constant 16 : index
    %c128_39 = arith.constant 128 : index
    %31 = vector.load %arg5[%c16_38, %c128_39] : memref<32x192xf32, #tpu.memory_space<vmem>>, vector<15x64xf32>
    tpu.vector_store %arg5[%c16_38, %c128_39], %30 {strides = array<i32>} : memref<32x192xf32, #tpu.memory_space<vmem>>, vector<15x64xf32>,
    %cst_40 = arith.constant 0.000000e+00 : f32
    %32 = vector.broadcast %cst_40 : f32 to vector<1x64xf32>
    %c16_41 = arith.constant 16 : index
    %c0_42 = arith.constant 0 : index
    %33 = vector.load %arg5[%c16_41, %c0_42] : memref<32x192xf32, #tpu.memory_space<vmem>>, vector<1x64xf32>
    tpu.vector_store %arg5[%c16_41, %c0_42], %32 {strides = array<i32>} : memref<32x192xf32, #tpu.memory_space<vmem>>, vector<1x64xf32>,
    %cst_43 = arith.constant 0.000000e+00 : f32
    %34 = vector.broadcast %cst_43 : f32 to vector<1x64xf32>
    %c31 = arith.constant 31 : index
    %c128_44 = arith.constant 128 : index
    %35 = vector.load %arg5[%c31, %c128_44] : memref<32x192xf32, #tpu.memory_space<vmem>>, vector<1x64xf32>
    tpu.vector_store %arg5[%c31, %c128_44], %34 {strides = array<i32>} : memref<32x192xf32, #tpu.memory_space<vmem>>, vector<1x64xf32>,
    %c0_45 = arith.constant 0 : index
    %c0_46 = arith.constant 0 : index
    %36 = vector.load %arg5[%c0_45, %c0_46] : memref<32x192xf32, #tpu.memory_space<vmem>>, vector<32x192xf32>
    %c0_47 = arith.constant 0 : index
    %c0_48 = arith.constant 0 : index
    %37 = vector.load %arg2[%c0_47, %c0_48] : memref<192x128xf32, #tpu.memory_space<vmem>>, vector<192x128xf32>
    %cst_49 = arith.constant dense<0.000000e+00> : vector<32x128xf32>
    %38 = tpu.matmul %36, %37, %cst_49 {dimension_numbers = #tpu.dot_dimension_numbers<[1], [0], [0], [1], [0, 0, 1, 1], [], []>} : vector<32x192xf32>, vector<192x128xf32>, vector<32x128xf32> -> vector<32x128xf32>
    %39 = vector.extract_strided_slice %38 {offsets = [0, 0], sizes = [16, 128], strides = [1, 1]} : vector<32x128xf32> to vector<16x128xf32>
    %c0_50 = arith.constant 0 : index
    %c0_51 = arith.constant 0 : index
    %c0_52 = arith.constant 0 : index
    %40 = vector.load %arg3[%c0_50, %c0_51, %c0_52] : memref<2x16x128xf32, #tpu.memory_space<vmem>>, vector<1x16x128xf32>
    %41 = vector.shape_cast %40 : vector<1x16x128xf32> to vector<16x128xf32>
    %42 = vector.shape_cast %39 : vector<16x128xf32> to vector<1x16x128xf32>
    tpu.vector_store %arg3[%c0_50, %c0_51, %c0_52], %42 {strides = array<i32>} : memref<2x16x128xf32, #tpu.memory_space<vmem>>, vector<1x16x128xf32>,
    %43 = vector.extract_strided_slice %38 {offsets = [16, 0], sizes = [16, 128], strides = [1, 1]} : vector<32x128xf32> to vector<16x128xf32>
    %c1_53 = arith.constant 1 : index
    %c0_54 = arith.constant 0 : index
    %c0_55 = arith.constant 0 : index
    %44 = vector.load %arg3[%c1_53, %c0_54, %c0_55] : memref<2x16x128xf32, #tpu.memory_space<vmem>>, vector<1x16x128xf32>
    %45 = vector.shape_cast %44 : vector<1x16x128xf32> to vector<16x128xf32>
    %46 = vector.shape_cast %43 : vector<16x128xf32> to vector<1x16x128xf32>
    tpu.vector_store %arg3[%c1_53, %c0_54, %c0_55], %46 {strides = array<i32>} : memref<2x16x128xf32, #tpu.memory_space<vmem>>, vector<1x16x128xf32>,
    %cst_56 = arith.constant dense<0.000000e+00> : vector<128xf32>
    %47 = vector.multi_reduction <add>, %38, %cst_56 [0] : vector<32x128xf32> to vector<128xf32>
    %48 = vector.shape_cast %47 : vector<128xf32> to vector<1x128xf32>
    %49 = arith.mulf %38, %38 : vector<32x128xf32>
    %cst_57 = arith.constant dense<0.000000e+00> : vector<128xf32>
    %50 = vector.multi_reduction <add>, %49, %cst_57 [0] : vector<32x128xf32> to vector<128xf32>
    %51 = vector.shape_cast %50 : vector<128xf32> to vector<1x128xf32>
    %52 = tpu.concatenate %48, %51 in 0 : vector<1x128xf32>, vector<1x128xf32> -> vector<2x128xf32>
    %c0_58 = arith.constant 0 : index
    %c0_59 = arith.constant 0 : index
    %c0_60 = arith.constant 0 : index
    %53 = vector.load %arg4[%c0_58, %c0_59, %c0_60] : memref<1x2x128xf32, #tpu.memory_space<vmem>>, vector<1x2x128xf32>
    %54 = vector.shape_cast %53 : vector<1x2x128xf32> to vector<2x128xf32>
    %55 = vector.shape_cast %52 : vector<2x128xf32> to vector<1x2x128xf32>
    tpu.vector_store %arg4[%c0_58, %c0_59, %c0_60], %55 {strides = array<i32>} : memref<1x2x128xf32, #tpu.memory_space<vmem>>, vector<1x2x128xf32>,
    return
  }
  func.func @transform_0(%arg0: i32) -> (i32, i32, i32, i32) {
    %c0_i32 = arith.constant 0 : i32
    %c0_i32_0 = arith.constant 0 : i32
    %c0_i32_1 = arith.constant 0 : i32
    %c0_i32_2 = arith.constant 0 : i32
    return %arg0, %c0_i32, %c0_i32_0, %c0_i32_1 : i32, i32, i32, i32
  }
  func.func @transform_1(%arg0: i32) -> (i32, i32) {
    %c0_i32 = arith.constant 0 : i32
    %c0_i32_0 = arith.constant 0 : i32
    %c0_i32_1 = arith.constant 0 : i32
    return %c0_i32, %c0_i32_0 : i32, i32
  }
  func.func @transform_2(%arg0: i32) -> (i32, i32, i32) {
    %c0_i32 = arith.constant 0 : i32
    %c0_i32_0 = arith.constant 0 : i32
    %c0_i32_1 = arith.constant 0 : i32
    return %arg0, %c0_i32, %c0_i32_0 : i32, i32, i32
  }
  func.func @transform_3(%arg0: i32) -> (i32, i32, i32) {
    %c0_i32 = arith.constant 0 : i32
    %c0_i32_0 = arith.constant 0 : i32
    %c0_i32_1 = arith.constant 0 : i32
    return %arg0, %c0_i32, %c0_i32_0 : i32, i32, i32
  }
}

module attributes {stable_mosaic.version = 11 : i64} {
  func.func @_conv_bn_stats_kernel(%arg0: i32, %arg1: memref<2x16x128xf32, #tpu.memory_space<vmem>>, %arg2: memref<1x128xf32, #tpu.memory_space<vmem>>, %arg3: memref<1x128xf32, #tpu.memory_space<vmem>>, %arg4: memref<384x128xf32, #tpu.memory_space<vmem>>, %arg5: memref<2x16x128xf32, #tpu.memory_space<vmem>>, %arg6: memref<1x2x128xf32, #tpu.memory_space<vmem>>, %arg7: memref<32x384xf32, #tpu.memory_space<vmem>>) attributes {dimension_semantics = [#tpu.dimension_semantics<parallel>], iteration_bounds = array<i64: 1>, scalar_prefetch = 0 : i64, scratch_operands = 1 : i64, tpu.core_type = #tpu.core_type<tc>, window_params = [{transform_indices = @transform_0, window_bounds = array<i64: 2, 16, 128>}, {pipeline_mode = #tpu.pipeline_mode<synchronous>, transform_indices = @transform_1, window_bounds = array<i64: 1, 128>}, {pipeline_mode = #tpu.pipeline_mode<synchronous>, transform_indices = @transform_2, window_bounds = array<i64: 1, 128>}, {pipeline_mode = #tpu.pipeline_mode<synchronous>, transform_indices = @transform_3, window_bounds = array<i64: 384, 128>}, {transform_indices = @transform_4, window_bounds = array<i64: 2, 16, 128>}, {transform_indices = @transform_5, window_bounds = array<i64: 1, 2, 128>}]} {
    %c0 = arith.constant 0 : index
    %c0_0 = arith.constant 0 : index
    %c0_1 = arith.constant 0 : index
    %0 = vector.load %arg1[%c0, %c0_0, %c0_1] : memref<2x16x128xf32, #tpu.memory_space<vmem>>, vector<1x16x128xf32>
    %1 = vector.shape_cast %0 : vector<1x16x128xf32> to vector<16x128xf32>
    %c0_2 = arith.constant 0 : index
    %c0_3 = arith.constant 0 : index
    %2 = vector.load %arg2[%c0_2, %c0_3] : memref<1x128xf32, #tpu.memory_space<vmem>>, vector<1x128xf32>
    %3 = vector.broadcast %2 : vector<1x128xf32> to vector<16x128xf32>
    %4 = arith.mulf %1, %3 : vector<16x128xf32>
    %c0_4 = arith.constant 0 : index
    %c0_5 = arith.constant 0 : index
    %5 = vector.load %arg3[%c0_4, %c0_5] : memref<1x128xf32, #tpu.memory_space<vmem>>, vector<1x128xf32>
    %6 = vector.broadcast %5 : vector<1x128xf32> to vector<16x128xf32>
    %7 = arith.addf %4, %6 : vector<16x128xf32>
    %cst = arith.constant 0.000000e+00 : f32
    %8 = vector.broadcast %cst : f32 to vector<16x128xf32>
    %9 = arith.maximumf %7, %8 : vector<16x128xf32>
    %c0_6 = arith.constant 0 : index
    %c128 = arith.constant 128 : index
    %10 = vector.load %arg7[%c0_6, %c128] : memref<32x384xf32, #tpu.memory_space<vmem>>, vector<16x128xf32>
    tpu.vector_store %arg7[%c0_6, %c128], %9 {strides = array<i32>} : memref<32x384xf32, #tpu.memory_space<vmem>>, vector<16x128xf32>,
    %11 = vector.extract_strided_slice %9 {offsets = [0, 0], sizes = [15, 128], strides = [1, 1]} : vector<16x128xf32> to vector<15x128xf32>
    %c1 = arith.constant 1 : index
    %c0_7 = arith.constant 0 : index
    %12 = vector.load %arg7[%c1, %c0_7] : memref<32x384xf32, #tpu.memory_space<vmem>>, vector<15x128xf32>
    tpu.vector_store %arg7[%c1, %c0_7], %11 {strides = array<i32>} : memref<32x384xf32, #tpu.memory_space<vmem>>, vector<15x128xf32>,
    %13 = vector.extract_strided_slice %9 {offsets = [1, 0], sizes = [15, 128], strides = [1, 1]} : vector<16x128xf32> to vector<15x128xf32>
    %c0_8 = arith.constant 0 : index
    %c256 = arith.constant 256 : index
    %14 = vector.load %arg7[%c0_8, %c256] : memref<32x384xf32, #tpu.memory_space<vmem>>, vector<15x128xf32>
    tpu.vector_store %arg7[%c0_8, %c256], %13 {strides = array<i32>} : memref<32x384xf32, #tpu.memory_space<vmem>>, vector<15x128xf32>,
    %cst_9 = arith.constant 0.000000e+00 : f32
    %15 = vector.broadcast %cst_9 : f32 to vector<1x128xf32>
    %c0_10 = arith.constant 0 : index
    %c0_11 = arith.constant 0 : index
    %16 = vector.load %arg7[%c0_10, %c0_11] : memref<32x384xf32, #tpu.memory_space<vmem>>, vector<1x128xf32>
    tpu.vector_store %arg7[%c0_10, %c0_11], %15 {strides = array<i32>} : memref<32x384xf32, #tpu.memory_space<vmem>>, vector<1x128xf32>,
    %cst_12 = arith.constant 0.000000e+00 : f32
    %17 = vector.broadcast %cst_12 : f32 to vector<1x128xf32>
    %c15 = arith.constant 15 : index
    %c256_13 = arith.constant 256 : index
    %18 = vector.load %arg7[%c15, %c256_13] : memref<32x384xf32, #tpu.memory_space<vmem>>, vector<1x128xf32>
    tpu.vector_store %arg7[%c15, %c256_13], %17 {strides = array<i32>} : memref<32x384xf32, #tpu.memory_space<vmem>>, vector<1x128xf32>,
    %c1_14 = arith.constant 1 : index
    %c0_15 = arith.constant 0 : index
    %c0_16 = arith.constant 0 : index
    %19 = vector.load %arg1[%c1_14, %c0_15, %c0_16] : memref<2x16x128xf32, #tpu.memory_space<vmem>>, vector<1x16x128xf32>
    %20 = vector.shape_cast %19 : vector<1x16x128xf32> to vector<16x128xf32>
    %c0_17 = arith.constant 0 : index
    %c0_18 = arith.constant 0 : index
    %21 = vector.load %arg2[%c0_17, %c0_18] : memref<1x128xf32, #tpu.memory_space<vmem>>, vector<1x128xf32>
    %22 = vector.broadcast %21 : vector<1x128xf32> to vector<16x128xf32>
    %23 = arith.mulf %20, %22 : vector<16x128xf32>
    %c0_19 = arith.constant 0 : index
    %c0_20 = arith.constant 0 : index
    %24 = vector.load %arg3[%c0_19, %c0_20] : memref<1x128xf32, #tpu.memory_space<vmem>>, vector<1x128xf32>
    %25 = vector.broadcast %24 : vector<1x128xf32> to vector<16x128xf32>
    %26 = arith.addf %23, %25 : vector<16x128xf32>
    %cst_21 = arith.constant 0.000000e+00 : f32
    %27 = vector.broadcast %cst_21 : f32 to vector<16x128xf32>
    %28 = arith.maximumf %26, %27 : vector<16x128xf32>
    %c16 = arith.constant 16 : index
    %c128_22 = arith.constant 128 : index
    %29 = vector.load %arg7[%c16, %c128_22] : memref<32x384xf32, #tpu.memory_space<vmem>>, vector<16x128xf32>
    tpu.vector_store %arg7[%c16, %c128_22], %28 {strides = array<i32>} : memref<32x384xf32, #tpu.memory_space<vmem>>, vector<16x128xf32>,
    %30 = vector.extract_strided_slice %28 {offsets = [0, 0], sizes = [15, 128], strides = [1, 1]} : vector<16x128xf32> to vector<15x128xf32>
    %c17 = arith.constant 17 : index
    %c0_23 = arith.constant 0 : index
    %31 = vector.load %arg7[%c17, %c0_23] : memref<32x384xf32, #tpu.memory_space<vmem>>, vector<15x128xf32>
    tpu.vector_store %arg7[%c17, %c0_23], %30 {strides = array<i32>} : memref<32x384xf32, #tpu.memory_space<vmem>>, vector<15x128xf32>,
    %32 = vector.extract_strided_slice %28 {offsets = [1, 0], sizes = [15, 128], strides = [1, 1]} : vector<16x128xf32> to vector<15x128xf32>
    %c16_24 = arith.constant 16 : index
    %c256_25 = arith.constant 256 : index
    %33 = vector.load %arg7[%c16_24, %c256_25] : memref<32x384xf32, #tpu.memory_space<vmem>>, vector<15x128xf32>
    tpu.vector_store %arg7[%c16_24, %c256_25], %32 {strides = array<i32>} : memref<32x384xf32, #tpu.memory_space<vmem>>, vector<15x128xf32>,
    %cst_26 = arith.constant 0.000000e+00 : f32
    %34 = vector.broadcast %cst_26 : f32 to vector<1x128xf32>
    %c16_27 = arith.constant 16 : index
    %c0_28 = arith.constant 0 : index
    %35 = vector.load %arg7[%c16_27, %c0_28] : memref<32x384xf32, #tpu.memory_space<vmem>>, vector<1x128xf32>
    tpu.vector_store %arg7[%c16_27, %c0_28], %34 {strides = array<i32>} : memref<32x384xf32, #tpu.memory_space<vmem>>, vector<1x128xf32>,
    %cst_29 = arith.constant 0.000000e+00 : f32
    %36 = vector.broadcast %cst_29 : f32 to vector<1x128xf32>
    %c31 = arith.constant 31 : index
    %c256_30 = arith.constant 256 : index
    %37 = vector.load %arg7[%c31, %c256_30] : memref<32x384xf32, #tpu.memory_space<vmem>>, vector<1x128xf32>
    tpu.vector_store %arg7[%c31, %c256_30], %36 {strides = array<i32>} : memref<32x384xf32, #tpu.memory_space<vmem>>, vector<1x128xf32>,
    %c0_31 = arith.constant 0 : index
    %c0_32 = arith.constant 0 : index
    %38 = vector.load %arg7[%c0_31, %c0_32] : memref<32x384xf32, #tpu.memory_space<vmem>>, vector<32x384xf32>
    %c0_33 = arith.constant 0 : index
    %c0_34 = arith.constant 0 : index
    %39 = vector.load %arg4[%c0_33, %c0_34] : memref<384x128xf32, #tpu.memory_space<vmem>>, vector<384x128xf32>
    %cst_35 = arith.constant dense<0.000000e+00> : vector<32x128xf32>
    %40 = tpu.matmul %38, %39, %cst_35 {dimension_numbers = #tpu.dot_dimension_numbers<[1], [0], [0], [1], [0, 0, 1, 1], [], []>} : vector<32x384xf32>, vector<384x128xf32>, vector<32x128xf32> -> vector<32x128xf32>
    %41 = vector.extract_strided_slice %40 {offsets = [0, 0], sizes = [16, 128], strides = [1, 1]} : vector<32x128xf32> to vector<16x128xf32>
    %c0_36 = arith.constant 0 : index
    %c0_37 = arith.constant 0 : index
    %c0_38 = arith.constant 0 : index
    %42 = vector.load %arg5[%c0_36, %c0_37, %c0_38] : memref<2x16x128xf32, #tpu.memory_space<vmem>>, vector<1x16x128xf32>
    %43 = vector.shape_cast %42 : vector<1x16x128xf32> to vector<16x128xf32>
    %44 = vector.shape_cast %41 : vector<16x128xf32> to vector<1x16x128xf32>
    tpu.vector_store %arg5[%c0_36, %c0_37, %c0_38], %44 {strides = array<i32>} : memref<2x16x128xf32, #tpu.memory_space<vmem>>, vector<1x16x128xf32>,
    %45 = vector.extract_strided_slice %40 {offsets = [16, 0], sizes = [16, 128], strides = [1, 1]} : vector<32x128xf32> to vector<16x128xf32>
    %c1_39 = arith.constant 1 : index
    %c0_40 = arith.constant 0 : index
    %c0_41 = arith.constant 0 : index
    %46 = vector.load %arg5[%c1_39, %c0_40, %c0_41] : memref<2x16x128xf32, #tpu.memory_space<vmem>>, vector<1x16x128xf32>
    %47 = vector.shape_cast %46 : vector<1x16x128xf32> to vector<16x128xf32>
    %48 = vector.shape_cast %45 : vector<16x128xf32> to vector<1x16x128xf32>
    tpu.vector_store %arg5[%c1_39, %c0_40, %c0_41], %48 {strides = array<i32>} : memref<2x16x128xf32, #tpu.memory_space<vmem>>, vector<1x16x128xf32>,
    %cst_42 = arith.constant dense<0.000000e+00> : vector<128xf32>
    %49 = vector.multi_reduction <add>, %40, %cst_42 [0] : vector<32x128xf32> to vector<128xf32>
    %50 = vector.shape_cast %49 : vector<128xf32> to vector<1x128xf32>
    %51 = arith.mulf %40, %40 : vector<32x128xf32>
    %cst_43 = arith.constant dense<0.000000e+00> : vector<128xf32>
    %52 = vector.multi_reduction <add>, %51, %cst_43 [0] : vector<32x128xf32> to vector<128xf32>
    %53 = vector.shape_cast %52 : vector<128xf32> to vector<1x128xf32>
    %54 = tpu.concatenate %50, %53 in 0 : vector<1x128xf32>, vector<1x128xf32> -> vector<2x128xf32>
    %c0_44 = arith.constant 0 : index
    %c0_45 = arith.constant 0 : index
    %c0_46 = arith.constant 0 : index
    %55 = vector.load %arg6[%c0_44, %c0_45, %c0_46] : memref<1x2x128xf32, #tpu.memory_space<vmem>>, vector<1x2x128xf32>
    %56 = vector.shape_cast %55 : vector<1x2x128xf32> to vector<2x128xf32>
    %57 = vector.shape_cast %54 : vector<2x128xf32> to vector<1x2x128xf32>
    tpu.vector_store %arg6[%c0_44, %c0_45, %c0_46], %57 {strides = array<i32>} : memref<1x2x128xf32, #tpu.memory_space<vmem>>, vector<1x2x128xf32>,
    return
  }
  func.func @transform_0(%arg0: i32) -> (i32, i32, i32) {
    %c0_i32 = arith.constant 0 : i32
    %c0_i32_0 = arith.constant 0 : i32
    %c0_i32_1 = arith.constant 0 : i32
    return %arg0, %c0_i32, %c0_i32_0 : i32, i32, i32
  }
  func.func @transform_1(%arg0: i32) -> (i32, i32) {
    %c0_i32 = arith.constant 0 : i32
    %c0_i32_0 = arith.constant 0 : i32
    %c0_i32_1 = arith.constant 0 : i32
    return %c0_i32, %c0_i32_0 : i32, i32
  }
  func.func @transform_2(%arg0: i32) -> (i32, i32) {
    %c0_i32 = arith.constant 0 : i32
    %c0_i32_0 = arith.constant 0 : i32
    %c0_i32_1 = arith.constant 0 : i32
    return %c0_i32, %c0_i32_0 : i32, i32
  }
  func.func @transform_3(%arg0: i32) -> (i32, i32) {
    %c0_i32 = arith.constant 0 : i32
    %c0_i32_0 = arith.constant 0 : i32
    %c0_i32_1 = arith.constant 0 : i32
    return %c0_i32, %c0_i32_0 : i32, i32
  }
  func.func @transform_4(%arg0: i32) -> (i32, i32, i32) {
    %c0_i32 = arith.constant 0 : i32
    %c0_i32_0 = arith.constant 0 : i32
    %c0_i32_1 = arith.constant 0 : i32
    return %arg0, %c0_i32, %c0_i32_0 : i32, i32, i32
  }
  func.func @transform_5(%arg0: i32) -> (i32, i32, i32) {
    %c0_i32 = arith.constant 0 : i32
    %c0_i32_0 = arith.constant 0 : i32
    %c0_i32_1 = arith.constant 0 : i32
    return %arg0, %c0_i32, %c0_i32_0 : i32, i32, i32
  }
}

module attributes {stable_mosaic.version = 11 : i64} {
  func.func @_bn_relu_nchw_kernel(%arg0: i32, %arg1: memref<2x16x128xf32, #tpu.memory_space<vmem>>, %arg2: memref<1x128xf32, #tpu.memory_space<vmem>>, %arg3: memref<1x128xf32, #tpu.memory_space<vmem>>, %arg4: memref<2x8x16x16xf32, #tpu.memory_space<vmem>>) attributes {dimension_semantics = [#tpu.dimension_semantics<parallel>], iteration_bounds = array<i64: 1>, scalar_prefetch = 0 : i64, scratch_operands = 0 : i64, tpu.core_type = #tpu.core_type<tc>, window_params = [{transform_indices = @transform_0, window_bounds = array<i64: 2, 16, 128>}, {pipeline_mode = #tpu.pipeline_mode<synchronous>, transform_indices = @transform_1, window_bounds = array<i64: 1, 128>}, {pipeline_mode = #tpu.pipeline_mode<synchronous>, transform_indices = @transform_2, window_bounds = array<i64: 1, 128>}, {transform_indices = @transform_3, window_bounds = array<i64: 2, 8, 16, 16>}]} {
    %c0 = arith.constant 0 : index
    %c0_0 = arith.constant 0 : index
    %c0_1 = arith.constant 0 : index
    %0 = vector.load %arg1[%c0, %c0_0, %c0_1] : memref<2x16x128xf32, #tpu.memory_space<vmem>>, vector<1x16x128xf32>
    %1 = vector.shape_cast %0 : vector<1x16x128xf32> to vector<16x128xf32>
    %c0_2 = arith.constant 0 : index
    %c0_3 = arith.constant 0 : index
    %2 = vector.load %arg2[%c0_2, %c0_3] : memref<1x128xf32, #tpu.memory_space<vmem>>, vector<1x128xf32>
    %3 = vector.broadcast %2 : vector<1x128xf32> to vector<16x128xf32>
    %4 = arith.mulf %1, %3 : vector<16x128xf32>
    %c0_4 = arith.constant 0 : index
    %c0_5 = arith.constant 0 : index
    %5 = vector.load %arg3[%c0_4, %c0_5] : memref<1x128xf32, #tpu.memory_space<vmem>>, vector<1x128xf32>
    %6 = vector.broadcast %5 : vector<1x128xf32> to vector<16x128xf32>
    %7 = arith.addf %4, %6 : vector<16x128xf32>
    %cst = arith.constant 0.000000e+00 : f32
    %8 = vector.broadcast %cst : f32 to vector<16x128xf32>
    %9 = arith.maximumf %7, %8 : vector<16x128xf32>
    %10 = vector.extract_strided_slice %9 {offsets = [0, 0], sizes = [16, 16], strides = [1, 1]} : vector<16x128xf32> to vector<16x16xf32>
    %c0_6 = arith.constant 0 : index
    %c0_7 = arith.constant 0 : index
    %c0_8 = arith.constant 0 : index
    %c0_9 = arith.constant 0 : index
    %11 = vector.load %arg4[%c0_6, %c0_7, %c0_8, %c0_9] : memref<2x8x16x16xf32, #tpu.memory_space<vmem>>, vector<1x1x16x16xf32>
    %12 = vector.shape_cast %11 : vector<1x1x16x16xf32> to vector<16x16xf32>
    %13 = vector.shape_cast %10 : vector<16x16xf32> to vector<1x1x16x16xf32>
    tpu.vector_store %arg4[%c0_6, %c0_7, %c0_8, %c0_9], %13 {strides = array<i32>} : memref<2x8x16x16xf32, #tpu.memory_space<vmem>>, vector<1x1x16x16xf32>,
    %14 = vector.extract_strided_slice %9 {offsets = [0, 16], sizes = [16, 16], strides = [1, 1]} : vector<16x128xf32> to vector<16x16xf32>
    %c0_10 = arith.constant 0 : index
    %c1 = arith.constant 1 : index
    %c0_11 = arith.constant 0 : index
    %c0_12 = arith.constant 0 : index
    %15 = vector.load %arg4[%c0_10, %c1, %c0_11, %c0_12] : memref<2x8x16x16xf32, #tpu.memory_space<vmem>>, vector<1x1x16x16xf32>
    %16 = vector.shape_cast %15 : vector<1x1x16x16xf32> to vector<16x16xf32>
    %17 = vector.shape_cast %14 : vector<16x16xf32> to vector<1x1x16x16xf32>
    tpu.vector_store %arg4[%c0_10, %c1, %c0_11, %c0_12], %17 {strides = array<i32>} : memref<2x8x16x16xf32, #tpu.memory_space<vmem>>, vector<1x1x16x16xf32>,
    %18 = vector.extract_strided_slice %9 {offsets = [0, 32], sizes = [16, 16], strides = [1, 1]} : vector<16x128xf32> to vector<16x16xf32>
    %c0_13 = arith.constant 0 : index
    %c2 = arith.constant 2 : index
    %c0_14 = arith.constant 0 : index
    %c0_15 = arith.constant 0 : index
    %19 = vector.load %arg4[%c0_13, %c2, %c0_14, %c0_15] : memref<2x8x16x16xf32, #tpu.memory_space<vmem>>, vector<1x1x16x16xf32>
    %20 = vector.shape_cast %19 : vector<1x1x16x16xf32> to vector<16x16xf32>
    %21 = vector.shape_cast %18 : vector<16x16xf32> to vector<1x1x16x16xf32>
    tpu.vector_store %arg4[%c0_13, %c2, %c0_14, %c0_15], %21 {strides = array<i32>} : memref<2x8x16x16xf32, #tpu.memory_space<vmem>>, vector<1x1x16x16xf32>,
    %22 = vector.extract_strided_slice %9 {offsets = [0, 48], sizes = [16, 16], strides = [1, 1]} : vector<16x128xf32> to vector<16x16xf32>
    %c0_16 = arith.constant 0 : index
    %c3 = arith.constant 3 : index
    %c0_17 = arith.constant 0 : index
    %c0_18 = arith.constant 0 : index
    %23 = vector.load %arg4[%c0_16, %c3, %c0_17, %c0_18] : memref<2x8x16x16xf32, #tpu.memory_space<vmem>>, vector<1x1x16x16xf32>
    %24 = vector.shape_cast %23 : vector<1x1x16x16xf32> to vector<16x16xf32>
    %25 = vector.shape_cast %22 : vector<16x16xf32> to vector<1x1x16x16xf32>
    tpu.vector_store %arg4[%c0_16, %c3, %c0_17, %c0_18], %25 {strides = array<i32>} : memref<2x8x16x16xf32, #tpu.memory_space<vmem>>, vector<1x1x16x16xf32>,
    %26 = vector.extract_strided_slice %9 {offsets = [0, 64], sizes = [16, 16], strides = [1, 1]} : vector<16x128xf32> to vector<16x16xf32>
    %c0_19 = arith.constant 0 : index
    %c4 = arith.constant 4 : index
    %c0_20 = arith.constant 0 : index
    %c0_21 = arith.constant 0 : index
    %27 = vector.load %arg4[%c0_19, %c4, %c0_20, %c0_21] : memref<2x8x16x16xf32, #tpu.memory_space<vmem>>, vector<1x1x16x16xf32>
    %28 = vector.shape_cast %27 : vector<1x1x16x16xf32> to vector<16x16xf32>
    %29 = vector.shape_cast %26 : vector<16x16xf32> to vector<1x1x16x16xf32>
    tpu.vector_store %arg4[%c0_19, %c4, %c0_20, %c0_21], %29 {strides = array<i32>} : memref<2x8x16x16xf32, #tpu.memory_space<vmem>>, vector<1x1x16x16xf32>,
    %30 = vector.extract_strided_slice %9 {offsets = [0, 80], sizes = [16, 16], strides = [1, 1]} : vector<16x128xf32> to vector<16x16xf32>
    %c0_22 = arith.constant 0 : index
    %c5 = arith.constant 5 : index
    %c0_23 = arith.constant 0 : index
    %c0_24 = arith.constant 0 : index
    %31 = vector.load %arg4[%c0_22, %c5, %c0_23, %c0_24] : memref<2x8x16x16xf32, #tpu.memory_space<vmem>>, vector<1x1x16x16xf32>
    %32 = vector.shape_cast %31 : vector<1x1x16x16xf32> to vector<16x16xf32>
    %33 = vector.shape_cast %30 : vector<16x16xf32> to vector<1x1x16x16xf32>
    tpu.vector_store %arg4[%c0_22, %c5, %c0_23, %c0_24], %33 {strides = array<i32>} : memref<2x8x16x16xf32, #tpu.memory_space<vmem>>, vector<1x1x16x16xf32>,
    %34 = vector.extract_strided_slice %9 {offsets = [0, 96], sizes = [16, 16], strides = [1, 1]} : vector<16x128xf32> to vector<16x16xf32>
    %c0_25 = arith.constant 0 : index
    %c6 = arith.constant 6 : index
    %c0_26 = arith.constant 0 : index
    %c0_27 = arith.constant 0 : index
    %35 = vector.load %arg4[%c0_25, %c6, %c0_26, %c0_27] : memref<2x8x16x16xf32, #tpu.memory_space<vmem>>, vector<1x1x16x16xf32>
    %36 = vector.shape_cast %35 : vector<1x1x16x16xf32> to vector<16x16xf32>
    %37 = vector.shape_cast %34 : vector<16x16xf32> to vector<1x1x16x16xf32>
    tpu.vector_store %arg4[%c0_25, %c6, %c0_26, %c0_27], %37 {strides = array<i32>} : memref<2x8x16x16xf32, #tpu.memory_space<vmem>>, vector<1x1x16x16xf32>,
    %38 = vector.extract_strided_slice %9 {offsets = [0, 112], sizes = [16, 16], strides = [1, 1]} : vector<16x128xf32> to vector<16x16xf32>
    %c0_28 = arith.constant 0 : index
    %c7 = arith.constant 7 : index
    %c0_29 = arith.constant 0 : index
    %c0_30 = arith.constant 0 : index
    %39 = vector.load %arg4[%c0_28, %c7, %c0_29, %c0_30] : memref<2x8x16x16xf32, #tpu.memory_space<vmem>>, vector<1x1x16x16xf32>
    %40 = vector.shape_cast %39 : vector<1x1x16x16xf32> to vector<16x16xf32>
    %41 = vector.shape_cast %38 : vector<16x16xf32> to vector<1x1x16x16xf32>
    tpu.vector_store %arg4[%c0_28, %c7, %c0_29, %c0_30], %41 {strides = array<i32>} : memref<2x8x16x16xf32, #tpu.memory_space<vmem>>, vector<1x1x16x16xf32>,
    %c1_31 = arith.constant 1 : index
    %c0_32 = arith.constant 0 : index
    %c0_33 = arith.constant 0 : index
    %42 = vector.load %arg1[%c1_31, %c0_32, %c0_33] : memref<2x16x128xf32, #tpu.memory_space<vmem>>, vector<1x16x128xf32>
    %43 = vector.shape_cast %42 : vector<1x16x128xf32> to vector<16x128xf32>
    %c0_34 = arith.constant 0 : index
    %c0_35 = arith.constant 0 : index
    %44 = vector.load %arg2[%c0_34, %c0_35] : memref<1x128xf32, #tpu.memory_space<vmem>>, vector<1x128xf32>
    %45 = vector.broadcast %44 : vector<1x128xf32> to vector<16x128xf32>
    %46 = arith.mulf %43, %45 : vector<16x128xf32>
    %c0_36 = arith.constant 0 : index
    %c0_37 = arith.constant 0 : index
    %47 = vector.load %arg3[%c0_36, %c0_37] : memref<1x128xf32, #tpu.memory_space<vmem>>, vector<1x128xf32>
    %48 = vector.broadcast %47 : vector<1x128xf32> to vector<16x128xf32>
    %49 = arith.addf %46, %48 : vector<16x128xf32>
    %cst_38 = arith.constant 0.000000e+00 : f32
    %50 = vector.broadcast %cst_38 : f32 to vector<16x128xf32>
    %51 = arith.maximumf %49, %50 : vector<16x128xf32>
    %52 = vector.extract_strided_slice %51 {offsets = [0, 0], sizes = [16, 16], strides = [1, 1]} : vector<16x128xf32> to vector<16x16xf32>
    %c1_39 = arith.constant 1 : index
    %c0_40 = arith.constant 0 : index
    %c0_41 = arith.constant 0 : index
    %c0_42 = arith.constant 0 : index
    %53 = vector.load %arg4[%c1_39, %c0_40, %c0_41, %c0_42] : memref<2x8x16x16xf32, #tpu.memory_space<vmem>>, vector<1x1x16x16xf32>
    %54 = vector.shape_cast %53 : vector<1x1x16x16xf32> to vector<16x16xf32>
    %55 = vector.shape_cast %52 : vector<16x16xf32> to vector<1x1x16x16xf32>
    tpu.vector_store %arg4[%c1_39, %c0_40, %c0_41, %c0_42], %55 {strides = array<i32>} : memref<2x8x16x16xf32, #tpu.memory_space<vmem>>, vector<1x1x16x16xf32>,
    %56 = vector.extract_strided_slice %51 {offsets = [0, 16], sizes = [16, 16], strides = [1, 1]} : vector<16x128xf32> to vector<16x16xf32>
    %c1_43 = arith.constant 1 : index
    %c1_44 = arith.constant 1 : index
    %c0_45 = arith.constant 0 : index
    %c0_46 = arith.constant 0 : index
    %57 = vector.load %arg4[%c1_43, %c1_44, %c0_45, %c0_46] : memref<2x8x16x16xf32, #tpu.memory_space<vmem>>, vector<1x1x16x16xf32>
    %58 = vector.shape_cast %57 : vector<1x1x16x16xf32> to vector<16x16xf32>
    %59 = vector.shape_cast %56 : vector<16x16xf32> to vector<1x1x16x16xf32>
    tpu.vector_store %arg4[%c1_43, %c1_44, %c0_45, %c0_46], %59 {strides = array<i32>} : memref<2x8x16x16xf32, #tpu.memory_space<vmem>>, vector<1x1x16x16xf32>,
    %60 = vector.extract_strided_slice %51 {offsets = [0, 32], sizes = [16, 16], strides = [1, 1]} : vector<16x128xf32> to vector<16x16xf32>
    %c1_47 = arith.constant 1 : index
    %c2_48 = arith.constant 2 : index
    %c0_49 = arith.constant 0 : index
    %c0_50 = arith.constant 0 : index
    %61 = vector.load %arg4[%c1_47, %c2_48, %c0_49, %c0_50] : memref<2x8x16x16xf32, #tpu.memory_space<vmem>>, vector<1x1x16x16xf32>
    %62 = vector.shape_cast %61 : vector<1x1x16x16xf32> to vector<16x16xf32>
    %63 = vector.shape_cast %60 : vector<16x16xf32> to vector<1x1x16x16xf32>
    tpu.vector_store %arg4[%c1_47, %c2_48, %c0_49, %c0_50], %63 {strides = array<i32>} : memref<2x8x16x16xf32, #tpu.memory_space<vmem>>, vector<1x1x16x16xf32>,
    %64 = vector.extract_strided_slice %51 {offsets = [0, 48], sizes = [16, 16], strides = [1, 1]} : vector<16x128xf32> to vector<16x16xf32>
    %c1_51 = arith.constant 1 : index
    %c3_52 = arith.constant 3 : index
    %c0_53 = arith.constant 0 : index
    %c0_54 = arith.constant 0 : index
    %65 = vector.load %arg4[%c1_51, %c3_52, %c0_53, %c0_54] : memref<2x8x16x16xf32, #tpu.memory_space<vmem>>, vector<1x1x16x16xf32>
    %66 = vector.shape_cast %65 : vector<1x1x16x16xf32> to vector<16x16xf32>
    %67 = vector.shape_cast %64 : vector<16x16xf32> to vector<1x1x16x16xf32>
    tpu.vector_store %arg4[%c1_51, %c3_52, %c0_53, %c0_54], %67 {strides = array<i32>} : memref<2x8x16x16xf32, #tpu.memory_space<vmem>>, vector<1x1x16x16xf32>,
    %68 = vector.extract_strided_slice %51 {offsets = [0, 64], sizes = [16, 16], strides = [1, 1]} : vector<16x128xf32> to vector<16x16xf32>
    %c1_55 = arith.constant 1 : index
    %c4_56 = arith.constant 4 : index
    %c0_57 = arith.constant 0 : index
    %c0_58 = arith.constant 0 : index
    %69 = vector.load %arg4[%c1_55, %c4_56, %c0_57, %c0_58] : memref<2x8x16x16xf32, #tpu.memory_space<vmem>>, vector<1x1x16x16xf32>
    %70 = vector.shape_cast %69 : vector<1x1x16x16xf32> to vector<16x16xf32>
    %71 = vector.shape_cast %68 : vector<16x16xf32> to vector<1x1x16x16xf32>
    tpu.vector_store %arg4[%c1_55, %c4_56, %c0_57, %c0_58], %71 {strides = array<i32>} : memref<2x8x16x16xf32, #tpu.memory_space<vmem>>, vector<1x1x16x16xf32>,
    %72 = vector.extract_strided_slice %51 {offsets = [0, 80], sizes = [16, 16], strides = [1, 1]} : vector<16x128xf32> to vector<16x16xf32>
    %c1_59 = arith.constant 1 : index
    %c5_60 = arith.constant 5 : index
    %c0_61 = arith.constant 0 : index
    %c0_62 = arith.constant 0 : index
    %73 = vector.load %arg4[%c1_59, %c5_60, %c0_61, %c0_62] : memref<2x8x16x16xf32, #tpu.memory_space<vmem>>, vector<1x1x16x16xf32>
    %74 = vector.shape_cast %73 : vector<1x1x16x16xf32> to vector<16x16xf32>
    %75 = vector.shape_cast %72 : vector<16x16xf32> to vector<1x1x16x16xf32>
    tpu.vector_store %arg4[%c1_59, %c5_60, %c0_61, %c0_62], %75 {strides = array<i32>} : memref<2x8x16x16xf32, #tpu.memory_space<vmem>>, vector<1x1x16x16xf32>,
    %76 = vector.extract_strided_slice %51 {offsets = [0, 96], sizes = [16, 16], strides = [1, 1]} : vector<16x128xf32> to vector<16x16xf32>
    %c1_63 = arith.constant 1 : index
    %c6_64 = arith.constant 6 : index
    %c0_65 = arith.constant 0 : index
    %c0_66 = arith.constant 0 : index
    %77 = vector.load %arg4[%c1_63, %c6_64, %c0_65, %c0_66] : memref<2x8x16x16xf32, #tpu.memory_space<vmem>>, vector<1x1x16x16xf32>
    %78 = vector.shape_cast %77 : vector<1x1x16x16xf32> to vector<16x16xf32>
    %79 = vector.shape_cast %76 : vector<16x16xf32> to vector<1x1x16x16xf32>
    tpu.vector_store %arg4[%c1_63, %c6_64, %c0_65, %c0_66], %79 {strides = array<i32>} : memref<2x8x16x16xf32, #tpu.memory_space<vmem>>, vector<1x1x16x16xf32>,
    %80 = vector.extract_strided_slice %51 {offsets = [0, 112], sizes = [16, 16], strides = [1, 1]} : vector<16x128xf32> to vector<16x16xf32>
    %c1_67 = arith.constant 1 : index
    %c7_68 = arith.constant 7 : index
    %c0_69 = arith.constant 0 : index
    %c0_70 = arith.constant 0 : index
    %81 = vector.load %arg4[%c1_67, %c7_68, %c0_69, %c0_70] : memref<2x8x16x16xf32, #tpu.memory_space<vmem>>, vector<1x1x16x16xf32>
    %82 = vector.shape_cast %81 : vector<1x1x16x16xf32> to vector<16x16xf32>
    %83 = vector.shape_cast %80 : vector<16x16xf32> to vector<1x1x16x16xf32>
    tpu.vector_store %arg4[%c1_67, %c7_68, %c0_69, %c0_70], %83 {strides = array<i32>} : memref<2x8x16x16xf32, #tpu.memory_space<vmem>>, vector<1x1x16x16xf32>,
    return
  }
  func.func @transform_0(%arg0: i32) -> (i32, i32, i32) {
    %c0_i32 = arith.constant 0 : i32
    %c0_i32_0 = arith.constant 0 : i32
    %c0_i32_1 = arith.constant 0 : i32
    return %arg0, %c0_i32, %c0_i32_0 : i32, i32, i32
  }
  func.func @transform_1(%arg0: i32) -> (i32, i32) {
    %c0_i32 = arith.constant 0 : i32
    %c0_i32_0 = arith.constant 0 : i32
    %c0_i32_1 = arith.constant 0 : i32
    return %c0_i32, %c0_i32_0 : i32, i32
  }
  func.func @transform_2(%arg0: i32) -> (i32, i32) {
    %c0_i32 = arith.constant 0 : i32
    %c0_i32_0 = arith.constant 0 : i32
    %c0_i32_1 = arith.constant 0 : i32
    return %c0_i32, %c0_i32_0 : i32, i32
  }
  func.func @transform_3(%arg0: i32) -> (i32, i32, i32, i32) {
    %c0_i32 = arith.constant 0 : i32
    %c0_i32_0 = arith.constant 0 : i32
    %c0_i32_1 = arith.constant 0 : i32
    %c0_i32_2 = arith.constant 0 : i32
    return %arg0, %c0_i32, %c0_i32_0, %c0_i32_1 : i32, i32, i32, i32
  }
}

</mosaic_0001>

<llo_original>
// kernel: double_conv2d.5
$region0: #{double_conv2d.5}
  #allocation0 [shape = 'u32[]', space=smem, size = 0x4, offset = 0x4, fixed_abs, tag = 'smem constant byte address 0x4 - core index']
  #allocation1 [shape = 'u32[144,128]{1,0:T(1,128)}', space=vmem, size = 0x12000, scoped, tag = 'internal scratch']
  %s0 = inlined_call_operand.vmem [shape: f32[2,16,128], index: 0, kind: input, shape index: {}]
  %s1 = inlined_call_operand.vmem [shape: f32[1,128], index: 1, kind: input, shape index: {}]
  %s2 = inlined_call_operand.vmem [shape: f32[1,128], index: 2, kind: input, shape index: {}]
  %s3 = inlined_call_operand.hbm [shape: f32[2,8,16,16], index: 3, kind: output, shape index: {}]
  %s4 = sld [smem:[#allocation0]]
  $region22: #{double_conv2d.5} parent=0
    _
  %s6 = ssub.s32 1, %s4
  %s7 = scalar_select 0, %s6, %s4
  $region1: #{double_conv2d.5} parent=0
    #allocation2 [shape = 'u8[131072]{0}', space=vmem, size = 0x20000, scoped, tag = 'output window, operand 0, single buffered']
    #allocation3 [shape = 's32[1]{0}', space=sflag, size = 0x4, scoped, tag = 'scoped memory for double_conv2d.5']
    %8 = vsyncpa [#allocation3], 0
    // Predicated region
    $region2: #{double_conv2d.5} parent=1 // pred_check
      _
    $region3: #{double_conv2d.5} parent=1 // pred_check_branch
      %10 = sbr.rel (0) target = $region5
    $region4: #{double_conv2d.5} parent=1 // pred_region
      _
    $region5: #{double_conv2d.5} parent=1 // pred_fallthru
      _
    // Predicated region
    $region6: #{double_conv2d.5} parent=1 // pred_check
      _
    $region7: #{double_conv2d.5} parent=1 // pred_check_branch
      %12 = sbr.rel (0) target = $region9
    $region8: #{double_conv2d.5} parent=1 // pred_region
      _
    $region9: #{double_conv2d.5} parent=1 // pred_fallthru
      _
    // Predicated region
    $region10: #{double_conv2d.5} parent=1 // pred_check
      _
    $region11: #{double_conv2d.5} parent=1 // pred_check_branch
      %14 = sbr.rel (0) target = $region13
    $region12: #{double_conv2d.5} parent=1 // pred_region
      _
    $region13: #{double_conv2d.5} parent=1 // pred_fallthru
      _
    %v15 = vld [vmem:[%s0] sm:$0xff]
    %v16 = vld [vmem:[%s0 + $0x8] sm:$0xff]
    %v17 = vld [vmem:[%s1] sm:$0x1]
    %v19 = vlaneseq
    %v20 = vshrl.u32 %v19, 7
    %v21 = vsub.s32 0, %v20
    %v22 = vrot.slane %v17, %v21
    %v24 = vmul.f32 %v15, %v22
    %v25 = vmul.f32 %v16, %v22
    %v26 = vld [vmem:[%s2] sm:$0x1]
    %v28 = vlaneseq
    %v29 = vshrl.u32 %v28, 7
    %v30 = vsub.s32 0, %v29
    %v31 = vrot.slane %v26, %v30
    %v33 = vadd.f32 %v24, %v31
    %v34 = vadd.f32 %v25, %v31
    %v35 = vmax.f32 %v33, 0.0
    %v36 = vmax.f32 %v34, 0.0
    %vm37 = vcmask 130048
    %38 = vst.msk [vmem:[#allocation2] sm:$0xff] %vm37, %v35
    %39 = vst.msk [vmem:[#allocation2 + $0x8] sm:$0xff] %vm37, %v36
    %42 = vrot.lane.b32.xlu0 %v35, 112
    %v43 = vpop.permute.xlu0 %42
    %44 = vrot.lane.b32.xlu0 %v36, 112
    %v45 = vpop.permute.xlu0 %44
    %s48 = scalar_lea.vmem [#allocation2], 16
    %49 = vst.msk [vmem:[%s48] sm:$0xff] %vm37, %v43
    %50 = vst.msk [vmem:[%s48 + $0x8] sm:$0xff] %vm37, %v45
    %51 = vrot.lane.b32.xlu0 %v35, 96
    %v52 = vpop.permute.xlu0 %51
    %53 = vrot.lane.b32.xlu0 %v36, 96
    %v54 = vpop.permute.xlu0 %53
    %s57 = scalar_lea.vmem [#allocation2], 32
    %58 = vst.msk [vmem:[%s57] sm:$0xff] %vm37, %v52
    %59 = vst.msk [vmem:[%s57 + $0x8] sm:$0xff] %vm37, %v54
    %60 = vrot.lane.b32.xlu0 %v35, 80
    %v61 = vpop.permute.xlu0 %60
    %62 = vrot.lane.b32.xlu0 %v36, 80
    %v63 = vpop.permute.xlu0 %62
    %s66 = scalar_lea.vmem [#allocation2], 48
    %67 = vst.msk [vmem:[%s66] sm:$0xff] %vm37, %v61
    %68 = vst.msk [vmem:[%s66 + $0x8] sm:$0xff] %vm37, %v63
    %69 = vrot.lane.b32.xlu0 %v35, 64
    %v70 = vpop.permute.xlu0 %69
    %71 = vrot.lane.b32.xlu0 %v36, 64
    %v72 = vpop.permute.xlu0 %71
    %s75 = scalar_lea.vmem [#allocation2], 64
    %76 = vst.msk [vmem:[%s75] sm:$0xff] %vm37, %v70
    %77 = vst.msk [vmem:[%s75 + $0x8] sm:$0xff] %vm37, %v72
    %78 = vrot.lane.b32.xlu0 %v35, 48
    %v79 = vpop.permute.xlu0 %78
    %80 = vrot.lane.b32.xlu0 %v36, 48
    %v81 = vpop.permute.xlu0 %80
    %s84 = scalar_lea.vmem [#allocation2], 80
    %85 = vst.msk [vmem:[%s84] sm:$0xff] %vm37, %v79
    %86 = vst.msk [vmem:[%s84 + $0x8] sm:$0xff] %vm37, %v81
    %87 = vrot.lane.b32.xlu0 %v35, 32
    %v88 = vpop.permute.xlu0 %87
    %89 = vrot.lane.b32.xlu0 %v36, 32
    %v90 = vpop.permute.xlu0 %89
    %s93 = scalar_lea.vmem [#allocation2], 96
    %94 = vst.msk [vmem:[%s93] sm:$0xff] %vm37, %v88
    %95 = vst.msk [vmem:[%s93 + $0x8] sm:$0xff] %vm37, %v90
    %96 = vrot.lane.b32.xlu0 %v35, 16
    %v97 = vpop.permute.xlu0 %96
    %98 = vrot.lane.b32.xlu0 %v36, 16
    %v99 = vpop.permute.xlu0 %98
    %s102 = scalar_lea.vmem [#allocation2], 112
    %103 = vst.msk [vmem:[%s102] sm:$0xff] %vm37, %v97
    %104 = vst.msk [vmem:[%s102 + $0x8] sm:$0xff] %vm37, %v99
    %s105 = scalar_lea.vmem %s0, 16
    %v106 = vld [vmem:[%s105] sm:$0xff]
    %v107 = vld [vmem:[%s105 + $0x8] sm:$0xff]
    %v108 = vld [vmem:[%s1] sm:$0x1]
    %v110 = vlaneseq
    %v111 = vshrl.u32 %v110, 7
    %v112 = vsub.s32 0, %v111
    %v113 = vrot.slane %v108, %v112
    %v115 = vmul.f32 %v106, %v113
    %v116 = vmul.f32 %v107, %v113
    %v117 = vld [vmem:[%s2] sm:$0x1]
    %v119 = vlaneseq
    %v120 = vshrl.u32 %v119, 7
    %v121 = vsub.s32 0, %v120
    %v122 = vrot.slane %v117, %v121
    %v124 = vadd.f32 %v115, %v122
    %v125 = vadd.f32 %v116, %v122
    %v126 = vmax.f32 %v124, 0.0
    %v127 = vmax.f32 %v125, 0.0
    %s128 = scalar_lea.vmem [#allocation2], 128
    %129 = vst.msk [vmem:[%s128] sm:$0xff] %vm37, %v126
    %130 = vst.msk [vmem:[%s128 + $0x8] sm:$0xff] %vm37, %v127
    %133 = vrot.lane.b32.xlu0 %v126, 112
    %v134 = vpop.permute.xlu0 %133
    %135 = vrot.lane.b32.xlu0 %v127, 112
    %v136 = vpop.permute.xlu0 %135
    %s139 = scalar_lea.vmem [#allocation2], 144
    %140 = vst.msk [vmem:[%s139] sm:$0xff] %vm37, %v134
    %141 = vst.msk [vmem:[%s139 + $0x8] sm:$0xff] %vm37, %v136
    %142 = vrot.lane.b32.xlu0 %v126, 96
    %v143 = vpop.permute.xlu0 %142
    %144 = vrot.lane.b32.xlu0 %v127, 96
    %v145 = vpop.permute.xlu0 %144
    %s148 = scalar_lea.vmem [#allocation2], 160
    %149 = vst.msk [vmem:[%s148] sm:$0xff] %vm37, %v143
    %150 = vst.msk [vmem:[%s148 + $0x8] sm:$0xff] %vm37, %v145
    %151 = vrot.lane.b32.xlu0 %v126, 80
    %v152 = vpop.permute.xlu0 %151
    %153 = vrot.lane.b32.xlu0 %v127, 80
    %v154 = vpop.permute.xlu0 %153
    %s157 = scalar_lea.vmem [#allocation2], 176
    %158 = vst.msk [vmem:[%s157] sm:$0xff] %vm37, %v152
    %159 = vst.msk [vmem:[%s157 + $0x8] sm:$0xff] %vm37, %v154
    %160 = vrot.lane.b32.xlu0 %v126, 64
    %v161 = vpop.permute.xlu0 %160
    %162 = vrot.lane.b32.xlu0 %v127, 64
    %v163 = vpop.permute.xlu0 %162
    %s166 = scalar_lea.vmem [#allocation2], 192
    %167 = vst.msk [vmem:[%s166] sm:$0xff] %vm37, %v161
    %168 = vst.msk [vmem:[%s166 + $0x8] sm:$0xff] %vm37, %v163
    %169 = vrot.lane.b32.xlu0 %v126, 48
    %v170 = vpop.permute.xlu0 %169
    %171 = vrot.lane.b32.xlu0 %v127, 48
    %v172 = vpop.permute.xlu0 %171
    %s175 = scalar_lea.vmem [#allocation2], 208
    %176 = vst.msk [vmem:[%s175] sm:$0xff] %vm37, %v170
    %177 = vst.msk [vmem:[%s175 + $0x8] sm:$0xff] %vm37, %v172
    %178 = vrot.lane.b32.xlu0 %v126, 32
    %v179 = vpop.permute.xlu0 %178
    %180 = vrot.lane.b32.xlu0 %v127, 32
    %v181 = vpop.permute.xlu0 %180
    %s184 = scalar_lea.vmem [#allocation2], 224
    %185 = vst.msk [vmem:[%s184] sm:$0xff] %vm37, %v179
    %186 = vst.msk [vmem:[%s184 + $0x8] sm:$0xff] %vm37, %v181
    %187 = vrot.lane.b32.xlu0 %v126, 16
    %v188 = vpop.permute.xlu0 %187
    %189 = vrot.lane.b32.xlu0 %v127, 16
    %v190 = vpop.permute.xlu0 %189
    %s193 = scalar_lea.vmem [#allocation2], 240
    %194 = vst.msk [vmem:[%s193] sm:$0xff] %vm37, %v188
    %195 = vst.msk [vmem:[%s193 + $0x8] sm:$0xff] %vm37, %v190
    // Predicated region
    $region14: #{double_conv2d.5} parent=1 // pred_check
      _
    $region15: #{double_conv2d.5} parent=1 // pred_check_branch
      %197 = sbr.rel (0) target = $region17
    $region16: #{double_conv2d.5} parent=1 // pred_region
      %s199 = ssub.s32 4096, 4096
      %200 = vsyncadd [#allocation3], %s199
      %s201 = sshll.u32 [#allocation2], 4
      %s202 = int_to_ptr.vmem [resolvable:$true] %s201
      %207 = dma.vmem_to_hbm [thread:$0]  %s202, 4096, %s3, [#allocation3], 128, 128, 8
    $region17: #{double_conv2d.5} parent=1 // pred_fallthru
      _
    // Predicated region
    $region18: #{double_conv2d.5} parent=1 // pred_check
      _
    $region19: #{double_conv2d.5} parent=1 // pred_check_branch
      %209 = sbr.rel (0) target = $region21
    $region20: #{double_conv2d.5} parent=1 // pred_region
      %210 = dma.done [#allocation3], 4096
    $region21: #{double_conv2d.5} parent=1 // pred_fallthru
      _
    %211 = vsyncpa [#allocation3], 1

// kernel: double_conv2d.3
$region0: #{double_conv2d.3}
  #allocation0 [shape = 'u32[]', space=smem, size = 0x4, offset = 0x4, fixed_abs, tag = 'smem constant byte address 0x4 - core index']
  #allocation1 [shape = 'u32[144,128]{1,0:T(1,128)}', space=vmem, size = 0x12000, scoped, tag = 'internal scratch']
  #allocation2 [shape = 'f32[32,192]{1,0:T(8,128)}', space=vmem, size = 0x8000, scoped, tag = 'scratch operand']
  %s0 = inlined_call_operand.hbm [shape: f32[2,4,16,16], index: 0, kind: input, shape index: {}]
  %s1 = inlined_call_operand.hbm [shape: f32[192,128], index: 1, kind: input, shape index: {}]
  %s2 = inlined_call_operand.vmem [shape: f32[2,16,128], index: 2, kind: output, shape index: {0}]
  %s3 = inlined_call_operand.vmem [shape: f32[1,2,128], index: 3, kind: output, shape index: {1}]
  %4 = xla_tuple %s2, %s3
  %s5 = sld [smem:[#allocation0]]
  $region34: #{double_conv2d.3} parent=0
    _
  %s7 = ssub.s32 1, %s5
  %s8 = scalar_select 0, %s7, %s5
  $region1: #{double_conv2d.3} parent=0
    #allocation3 [shape = 'u8[65536]{0}', space=vmem, size = 0x10000, scoped, tag = 'input window, operand 0, single buffered']
    #allocation4 [shape = 's32[1]{0}', space=sflag, size = 0x4, scoped, tag = 'scoped memory for double_conv2d.3']
    #allocation5 [shape = 'u8[98304]{0}', space=vmem, size = 0x18000, scoped, tag = 'input window, operand 1, single buffered']
    #allocation6 [shape = 's32[1]{0}', space=sflag, size = 0x4, scoped, tag = 'scoped memory for double_conv2d.3']
    %9 = vsyncpa [#allocation4], 0
    %10 = vsyncpa [#allocation6], 0
    // Predicated region
    $region2: #{double_conv2d.3} parent=1 // pred_check
      _
    $region3: #{double_conv2d.3} parent=1 // pred_check_branch
      %12 = sbr.rel (0) target = $region5
    $region4: #{double_conv2d.3} parent=1 // pred_region
      %s14 = ssub.s32 2048, 2048
      %15 = vsyncadd [#allocation4], %s14
      %s16 = sshll.u32 [#allocation3], 4
      %s17 = int_to_ptr.vmem [resolvable:$true] %s16
      %22 = dma.hbm_to_vmem [thread:$0]  %s0, 2048, %s17, [#allocation4], 128, 128, 8
    $region5: #{double_conv2d.3} parent=1 // pred_fallthru
      _
    // Predicated region
    $region6: #{double_conv2d.3} parent=1 // pred_check
      _
    $region7: #{double_conv2d.3} parent=1 // pred_check_branch
      %24 = sbr.rel (0) target = $region9
    $region8: #{double_conv2d.3} parent=1 // pred_region
      %s26 = ssub.s32 3072, 3072
      %27 = vsyncadd [#allocation6], %s26
      %s28 = sshll.u32 [#allocation5], 4
      %s29 = int_to_ptr.vmem [resolvable:$true] %s28
      %34 = dma.hbm_to_vmem [thread:$0]  %s1, 3072, %s29, [#allocation6], 128, 128, 8
    $region9: #{double_conv2d.3} parent=1 // pred_fallthru
      _
    // Predicated region
    $region10: #{double_conv2d.3} parent=1 // pred_check
      _
    $region11: #{double_conv2d.3} parent=1 // pred_check_branch
      %36 = sbr.rel (0) target = $region13
    $region12: #{double_conv2d.3} parent=1 // pred_region
      %37 = dma.done [#allocation4], 2048
    $region13: #{double_conv2d.3} parent=1 // pred_fallthru
      _
    // Predicated region
    $region14: #{double_conv2d.3} parent=1 // pred_check
      _
    $region15: #{double_conv2d.3} parent=1 // pred_check_branch
      %39 = sbr.rel (0) target = $region17
    $region16: #{double_conv2d.3} parent=1 // pred_region
      %40 = dma.done [#allocation6], 3072
    $region17: #{double_conv2d.3} parent=1 // pred_fallthru
      _
    %v41 = vld [vmem:[#allocation3] sm:$0xff]
    %v42 = vld [vmem:[#allocation3 + $0x8] sm:$0xff]
    %s43 = scalar_lea.vmem [#allocation3], 16
    %v44 = vld [vmem:[%s43] sm:$0xff]
    %v45 = vld [vmem:[%s43 + $0x8] sm:$0xff]
    %s46 = scalar_lea.vmem [#allocation3], 32
    %v47 = vld [vmem:[%s46] sm:$0xff]
    %v48 = vld [vmem:[%s46 + $0x8] sm:$0xff]
    %s49 = scalar_lea.vmem [#allocation3], 48
    %v50 = vld [vmem:[%s49] sm:$0xff]
    %v51 = vld [vmem:[%s49 + $0x8] sm:$0xff]
    %54 = vrot.lane.b32.xlu0 %v44, 16
    %v55 = vpop.permute.xlu0 %54
    %56 = vrot.lane.b32.xlu0 %v45, 16
    %v57 = vpop.permute.xlu0 %56
    %62 = vrot.lane.b32.xlu0 %v47, 32
    %v63 = vpop.permute.xlu0 %62
    %64 = vrot.lane.b32.xlu0 %v48, 32
    %v65 = vpop.permute.xlu0 %64
    %70 = vrot.lane.b32.xlu0 %v50, 48
    %v71 = vpop.permute.xlu0 %70
    %72 = vrot.lane.b32.xlu0 %v51, 48
    %v73 = vpop.permute.xlu0 %72
    %vm76 = vcmask 130048
    %v77 = vsel %vm76, %v41, %v55
    %v78 = vsel %vm76, %v42, %v57
    %vm79 = vcmask 261120
    %v80 = vsel %vm79, %v77, %v63
    %v81 = vsel %vm79, %v78, %v65
    %vm82 = vcmask 392192
    %v83 = vsel %vm82, %v80, %v71
    %v84 = vsel %vm82, %v81, %v73
    %87 = vrot.lane.b32.xlu0 %v83, 64
    %v88 = vpop.permute.xlu0 %87
    %89 = vrot.lane.b32.xlu0 %v84, 64
    %v90 = vpop.permute.xlu0 %89
    %vm93 = vcmask 1048064
    %94 = vst.msk [vmem:[#allocation2] sm:$0xff] %vm93, %v88
    %95 = vst.msk [vmem:[#allocation2 + $0x10] sm:$0xff] %vm93, %v90
    %vm96 = vcmask 1040384
    %v97 = vrot.slane %v83, 7
    %v98 = vrot.slane %v84, 7
    %v99 = vsel %vm96, %v97, %v98
    %vm102 = vcmask 523265
    %103 = vst.msk [vmem:[#allocation2] sm:$0xfe] %vm102, %v97
    %vm104 = vcmask 523264
    %105 = vst.msk [vmem:[#allocation2 + $0x10] sm:$0xff] %vm104, %v99
    %vm106 = vcmask 1046528
    %v107 = vrot.slane %v83, 1
    %v108 = vrot.slane %v84, 1
    %v109 = vsel %vm106, %v107, %v108
    %112 = vst.msk [vmem:[#allocation2 + $0x8] sm:$0xff] %vm104, %v109
    %vm113 = vcmask 522240
    %114 = vst.msk [vmem:[#allocation2 + $0x18] sm:$0x7f] %vm113, %v108
    %vm115 = vcmask 516096
    %116 = vst.msk [vmem:[#allocation2] sm:$0x1] %vm115, 0.0
    %117 = vst.msk [vmem:[#allocation2 + $0x1f] sm:$0x1] %vm115, 0.0
    %s118 = scalar_lea.vmem [#allocation3], 64
    %v119 = vld [vmem:[%s118] sm:$0xff]
    %v120 = vld [vmem:[%s118 + $0x8] sm:$0xff]
    %s121 = scalar_lea.vmem [#allocation3], 80
    %v122 = vld [vmem:[%s121] sm:$0xff]
    %v123 = vld [vmem:[%s121 + $0x8] sm:$0xff]
    %s124 = scalar_lea.vmem [#allocation3], 96
    %v125 = vld [vmem:[%s124] sm:$0xff]
    %v126 = vld [vmem:[%s124 + $0x8] sm:$0xff]
    %s127 = scalar_lea.vmem [#allocation3], 112
    %v128 = vld [vmem:[%s127] sm:$0xff]
    %v129 = vld [vmem:[%s127 + $0x8] sm:$0xff]
    %132 = vrot.lane.b32.xlu0 %v122, 16
    %v133 = vpop.permute.xlu0 %132
    %134 = vrot.lane.b32.xlu0 %v123, 16
    %v135 = vpop.permute.xlu0 %134
    %140 = vrot.lane.b32.xlu0 %v125, 32
    %v141 = vpop.permute.xlu0 %140
    %142 = vrot.lane.b32.xlu0 %v126, 32
    %v143 = vpop.permute.xlu0 %142
    %148 = vrot.lane.b32.xlu0 %v128, 48
    %v149 = vpop.permute.xlu0 %148
    %150 = vrot.lane.b32.xlu0 %v129, 48
    %v151 = vpop.permute.xlu0 %150
    %v154 = vsel %vm76, %v119, %v133
    %v155 = vsel %vm76, %v120, %v135
    %v156 = vsel %vm79, %v154, %v141
    %v157 = vsel %vm79, %v155, %v143
    %v158 = vsel %vm82, %v156, %v149
    %v159 = vsel %vm82, %v157, %v151
    %162 = vrot.lane.b32.xlu0 %v158, 64
    %v163 = vpop.permute.xlu0 %162
    %164 = vrot.lane.b32.xlu0 %v159, 64
    %v165 = vpop.permute.xlu0 %164
    %168 = vst.msk [vmem:[#allocation2 + $0x20] sm:$0xff] %vm93, %v163
    %169 = vst.msk [vmem:[#allocation2 + $0x30] sm:$0xff] %vm93, %v165
    %v170 = vrot.slane %v158, 7
    %v171 = vrot.slane %v159, 7
    %v172 = vsel %vm96, %v170, %v171
    %175 = vst.msk [vmem:[#allocation2 + $0x20] sm:$0xfe] %vm102, %v170
    %176 = vst.msk [vmem:[#allocation2 + $0x30] sm:$0xff] %vm104, %v172
    %v177 = vrot.slane %v158, 1
    %v178 = vrot.slane %v159, 1
    %v179 = vsel %vm106, %v177, %v178
    %182 = vst.msk [vmem:[#allocation2 + $0x28] sm:$0xff] %vm104, %v179
    %183 = vst.msk [vmem:[#allocation2 + $0x38] sm:$0x7f] %vm113, %v178
    %184 = vst.msk [vmem:[#allocation2 + $0x20] sm:$0x1] %vm115, 0.0
    %185 = vst.msk [vmem:[#allocation2 + $0x3f] sm:$0x1] %vm115, 0.0
    %v186 = vld [vmem:[#allocation2] sm:$0xff]
    %v187 = vld [vmem:[#allocation2 + $0x8] sm:$0xff]
    %v188 = vld [vmem:[#allocation2 + $0x10] sm:$0xff]
    %v189 = vld [vmem:[#allocation2 + $0x18] sm:$0xff]
    %v190 = vld [vmem:[#allocation2 + $0x20] sm:$0xff]
    %v191 = vld [vmem:[#allocation2 + $0x28] sm:$0xff]
    %v192 = vld [vmem:[#allocation2 + $0x30] sm:$0xff]
    %v193 = vld [vmem:[#allocation2 + $0x38] sm:$0xff]
    %v194 = vld [vmem:[#allocation5] sm:$0xff]
    %v195 = vld [vmem:[#allocation5 + $0x8] sm:$0xff]
    %v196 = vld [vmem:[#allocation5 + $0x10] sm:$0xff]
    %v197 = vld [vmem:[#allocation5 + $0x18] sm:$0xff]
    %v198 = vld [vmem:[#allocation5 + $0x20] sm:$0xff]
    %v199 = vld [vmem:[#allocation5 + $0x28] sm:$0xff]
    %v200 = vld [vmem:[#allocation5 + $0x30] sm:$0xff]
    %v201 = vld [vmem:[#allocation5 + $0x38] sm:$0xff]
    %v202 = vld [vmem:[#allocation5 + $0x40] sm:$0xff]
    %v203 = vld [vmem:[#allocation5 + $0x48] sm:$0xff]
    %v204 = vld [vmem:[#allocation5 + $0x50] sm:$0xff]
    %v205 = vld [vmem:[#allocation5 + $0x58] sm:$0xff]
    %v206 = vld [vmem:[#allocation5 + $0x60] sm:$0xff]
    %v207 = vld [vmem:[#allocation5 + $0x68] sm:$0xff]
    %v208 = vld [vmem:[#allocation5 + $0x70] sm:$0xff]
    %v209 = vld [vmem:[#allocation5 + $0x78] sm:$0xff]
    %v210 = vld [vmem:[#allocation5 + $0x80] sm:$0xff]
    %v211 = vld [vmem:[#allocation5 + $0x88] sm:$0xff]
    %v212 = vld [vmem:[#allocation5 + $0x90] sm:$0xff]
    %v213 = vld [vmem:[#allocation5 + $0x98] sm:$0xff]
    %v214 = vld [vmem:[#allocation5 + $0xa0] sm:$0xff]
    %v215 = vld [vmem:[#allocation5 + $0xa8] sm:$0xff]
    %v216 = vld [vmem:[#allocation5 + $0xb0] sm:$0xff]
    %v217 = vld [vmem:[#allocation5 + $0xb8] sm:$0xff]
    %v219 = vsel %vm104, %v187, 0
    %v222 = vsel %vm104, %v189, 0
    %v225 = vsel %vm104, %v191, 0
    %v228 = vsel %vm104, %v193, 0
    %230 = vmatprep.subr.mxu0 0.0
    %231 = vmatpush1.msra.mxu0 %v209
    %232 = vmatprep.subr.mxu0 0.0
    %233 = vmatpush1.msra.mxu0 %v208
    %234 = vmatprep.subr.mxu0 0.0
    %235 = vmatpush1.msra.mxu0 %v207
    %236 = vmatprep.subr.mxu0 0.0
    %237 = vmatpush1.msra.mxu0 %v206
    %238 = vmatprep.subr.mxu0 0.0
    %239 = vmatpush1.msra.mxu0 %v205
    %240 = vmatprep.subr.mxu0 0.0
    %241 = vmatpush1.msra.mxu0 %v204
    %242 = vmatprep.subr.mxu0 0.0
    %243 = vmatpush1.msra.mxu0 %v203
    %244 = vmatprep.subr.mxu0 0.0
    %245 = vmatpush1.msra.mxu0 %v202
    %246 = vmatprep.subr.mxu0 0.0
    %247 = vmatpush1.msra.mxu0 %v201
    %248 = vmatprep.subr.mxu0 0.0
    %249 = vmatpush1.msra.mxu0 %v200
    %250 = vmatprep.subr.mxu0 0.0
    %251 = vmatpush1.msra.mxu0 %v199
    %252 = vmatprep.subr.mxu0 0.0
    %253 = vmatpush1.msra.mxu0 %v198
    %254 = vmatprep.subr.mxu0 0.0
    %255 = vmatpush1.msra.mxu0 %v197
    %256 = vmatprep.subr.mxu0 0.0
    %257 = vmatpush1.msra.mxu0 %v196
    %258 = vmatprep.subr.mxu0 0.0
    %259 = vmatpush1.msra.mxu0 %v195
    %260 = vmatprep.subr.mxu0 0.0
    %261 = vmatpush1.msra.mxu0 %v194
    %262 = vmatprep.subr.mxu0 0.0
    %263 = vmatpush2.msra.mxu0 0.0
    %264 = vmatprep.subr.mxu0 0.0
    %265 = vmatpush2.msra.mxu0 0.0
    %266 = vmatprep.subr.mxu0 0.0
    %267 = vmatpush2.msra.mxu0 0.0
    %268 = vmatprep.subr.mxu0 0.0
    %269 = vmatpush2.msra.mxu0 0.0
    %270 = vmatprep.subr.mxu0 0.0
    %271 = vmatpush2.msra.mxu0 0.0
    %272 = vmatprep.subr.mxu0 0.0
    %273 = vmatpush2.msra.mxu0 0.0
    %274 = vmatprep.subr.mxu0 0.0
    %275 = vmatpush2.msra.mxu0 0.0
    %276 = vmatprep.subr.mxu0 0.0
    %277 = vmatpush2.msra.mxu0 0.0
    %278 = vmatprep.subr.mxu0 0.0
    %279 = vmatpush2.msra.mxu0 %v217
    %280 = vmatprep.subr.mxu0 0.0
    %281 = vmatpush2.msra.mxu0 %v216
    %282 = vmatprep.subr.mxu0 0.0
    %283 = vmatpush2.msra.mxu0 %v215
    %284 = vmatprep.subr.mxu0 0.0
    %285 = vmatpush2.msra.mxu0 %v214
    %286 = vmatprep.subr.mxu0 0.0
    %287 = vmatpush2.msra.mxu0 %v213
    %288 = vmatprep.subr.mxu0 0.0
    %289 = vmatpush2.msra.mxu0 %v212
    %290 = vmatprep.subr.mxu0 0.0
    %291 = vmatpush2.msra.mxu0 %v211
    %292 = vmatprep.subr.mxu0 0.0
    %293 = vmatpush2.msra.mxu0 %v210
    %294 = vmatprep.mubr.f32.mxu0 %v219
    %295 = vmatmul.mubr.f32.gmra.mxu0 %v186
    %v296 = vpop.f32.mrf.mxu0
    %v297 = vadd.f32 0.0, %v296
    %v298 = vpop.f32.mrf.mxu0
    %299 = vmatprep.mubr.f32.mxu0 %v222
    %300 = vmatmul.mubr.f32.gmra.mxu0 %v188
    %v301 = vpop.f32.mrf.mxu0
    %v302 = vadd.f32 0.0, %v301
    %v303 = vpop.f32.mrf.mxu0
    %304 = vmatprep.mubr.f32.mxu0 %v225
    %305 = vmatmul.mubr.f32.gmra.mxu0 %v190
    %v306 = vpop.f32.mrf.mxu0
    %v307 = vadd.f32 0.0, %v306
    %v308 = vpop.f32.mrf.mxu0
    %309 = vmatprep.mubr.f32.mxu0 %v228
    %310 = vmatmul.mubr.f32.gmra.mxu0 %v192
    %v311 = vpop.f32.mrf.mxu0
    %v312 = vadd.f32 0.0, %v311
    %v313 = vpop.f32.mrf.mxu0
    %314 = vdwg.mxu0
    %315 = vst [vmem:[%s2] sm:$0xff] %v297
    %316 = vst [vmem:[%s2 + $0x8] sm:$0xff] %v302
    %s317 = scalar_lea.vmem %s2, 16
    %318 = vst [vmem:[%s317] sm:$0xff] %v307
    %319 = vst [vmem:[%s317 + $0x8] sm:$0xff] %v312
    %v320 = vadd.f32 %v297, %v302
    %v321 = vadd.f32 %v320, %v307
    %v322 = vadd.f32 %v321, %v312
    %v323 = vrot.slane %v322, 4
    %v324 = vadd.f32 %v322, %v323
    %v325 = vrot.slane %v324, 2
    %v326 = vadd.f32 %v324, %v325
    %v327 = vrot.slane %v326, 1
    %v328 = vadd.f32 %v326, %v327
    %v329 = vmul.f32 %v297, %v297
    %v330 = vmul.f32 %v302, %v302
    %v331 = vmul.f32 %v307, %v307
    %v332 = vmul.f32 %v312, %v312
    %v333 = vadd.f32 %v329, %v330
    %v334 = vadd.f32 %v333, %v331
    %v335 = vadd.f32 %v334, %v332
    %v336 = vrot.slane %v335, 4
    %v337 = vadd.f32 %v335, %v336
    %v338 = vrot.slane %v337, 2
    %v339 = vadd.f32 %v337, %v338
    %v340 = vrot.slane %v339, 1
    %v341 = vadd.f32 %v339, %v340
    %v342 = vsel %vm96, %v328, %v341
    %343 = vst [vmem:[%s3] sm:$0x3] %v342
    // Predicated region
    $region18: #{double_conv2d.3} parent=1 // pred_check
      _
    $region19: #{double_conv2d.3} parent=1 // pred_check_branch
      %345 = sbr.rel (0) target = $region21
    $region20: #{double_conv2d.3} parent=1 // pred_region
      _
    $region21: #{double_conv2d.3} parent=1 // pred_fallthru
      _
    // Predicated region
    $region22: #{double_conv2d.3} parent=1 // pred_check
      _
    $region23: #{double_conv2d.3} parent=1 // pred_check_branch
      %347 = sbr.rel (0) target = $region25
    $region24: #{double_conv2d.3} parent=1 // pred_region
      _
    $region25: #{double_conv2d.3} parent=1 // pred_fallthru
      _
    // Predicated region
    $region26: #{double_conv2d.3} parent=1 // pred_check
      _
    $region27: #{double_conv2d.3} parent=1 // pred_check_branch
      %349 = sbr.rel (0) target = $region29
    $region28: #{double_conv2d.3} parent=1 // pred_region
      _
    $region29: #{double_conv2d.3} parent=1 // pred_fallthru
      _
    // Predicated region
    $region30: #{double_conv2d.3} parent=1 // pred_check
      _
    $region31: #{double_conv2d.3} parent=1 // pred_check_branch
      %351 = sbr.rel (0) target = $region33
    $region32: #{double_conv2d.3} parent=1 // pred_region
      _
    $region33: #{double_conv2d.3} parent=1 // pred_fallthru
      _
    %352 = vsyncpa [#allocation4], 1
    %353 = vsyncpa [#allocation6], 1

// kernel: double_conv2d.4
$region0: #{double_conv2d.4}
  #allocation0 [shape = 'u32[]', space=smem, size = 0x4, offset = 0x4, fixed_abs, tag = 'smem constant byte address 0x4 - core index']
  #allocation1 [shape = 'u32[144,128]{1,0:T(1,128)}', space=vmem, size = 0x12000, scoped, tag = 'internal scratch']
  #allocation2 [shape = 'f32[32,384]{1,0:T(8,128)}', space=vmem, size = 0xc000, scoped, tag = 'scratch operand']
  %s0 = inlined_call_operand.vmem [shape: f32[2,16,128], index: 0, kind: input, shape index: {}]
  %s1 = inlined_call_operand.vmem [shape: f32[1,128], index: 1, kind: input, shape index: {}]
  %s2 = inlined_call_operand.vmem [shape: f32[1,128], index: 2, kind: input, shape index: {}]
  %s3 = inlined_call_operand.vmem [shape: f32[384,128], index: 3, kind: input, shape index: {}]
  %s4 = inlined_call_operand.vmem [shape: f32[2,16,128], index: 4, kind: output, shape index: {0}]
  %s5 = inlined_call_operand.vmem [shape: f32[1,2,128], index: 5, kind: output, shape index: {1}]
  %6 = xla_tuple %s4, %s5
  %s7 = sld [smem:[#allocation0]]
  $region34: #{double_conv2d.4} parent=0
    _
  %s9 = ssub.s32 1, %s7
  %s10 = scalar_select 0, %s9, %s7
  // Predicated region
  $region2: #{double_conv2d.4} parent=0 // pred_check
    _
  $region3: #{double_conv2d.4} parent=0 // pred_check_branch
    %12 = sbr.rel (0) target = $region5
  $region4: #{double_conv2d.4} parent=0 // pred_region
    _
  $region5: #{double_conv2d.4} parent=0 // pred_fallthru
    _
  // Predicated region
  $region6: #{double_conv2d.4} parent=0 // pred_check
    _
  $region7: #{double_conv2d.4} parent=0 // pred_check_branch
    %14 = sbr.rel (0) target = $region9
  $region8: #{double_conv2d.4} parent=0 // pred_region
    _
  $region9: #{double_conv2d.4} parent=0 // pred_fallthru
    _
  // Predicated region
  $region10: #{double_conv2d.4} parent=0 // pred_check
    _
  $region11: #{double_conv2d.4} parent=0 // pred_check_branch
    %16 = sbr.rel (0) target = $region13
  $region12: #{double_conv2d.4} parent=0 // pred_region
    _
  $region13: #{double_conv2d.4} parent=0 // pred_fallthru
    _
  // Predicated region
  $region14: #{double_conv2d.4} parent=0 // pred_check
    _
  $region15: #{double_conv2d.4} parent=0 // pred_check_branch
    %18 = sbr.rel (0) target = $region17
  $region16: #{double_conv2d.4} parent=0 // pred_region
    _
  $region17: #{double_conv2d.4} parent=0 // pred_fallthru
    _
  %v19 = vld [vmem:[%s0] sm:$0xff]
  %v20 = vld [vmem:[%s0 + $0x8] sm:$0xff]
  %v21 = vld [vmem:[%s1] sm:$0x1]
  %v23 = vlaneseq
  %v24 = vshrl.u32 %v23, 7
  %v25 = vsub.s32 0, %v24
  %v26 = vrot.slane %v21, %v25
  %v28 = vmul.f32 %v19, %v26
  %v29 = vmul.f32 %v20, %v26
  %v30 = vld [vmem:[%s2] sm:$0x1]
  %v32 = vlaneseq
  %v33 = vshrl.u32 %v32, 7
  %v34 = vsub.s32 0, %v33
  %v35 = vrot.slane %v30, %v34
  %v37 = vadd.f32 %v28, %v35
  %v38 = vadd.f32 %v29, %v35
  %v39 = vmax.f32 %v37, 0.0
  %v40 = vmax.f32 %v38, 0.0
  %41 = vst [vmem:[#allocation2 + $0x8] sm:$0xff] %v39
  %42 = vst [vmem:[#allocation2 + $0x20] sm:$0xff] %v40
  %vm45 = vcmask 1040384
  %v46 = vrot.slane %v39, 7
  %v47 = vrot.slane %v40, 7
  %v48 = vsel %vm45, %v46, %v47
  %51 = vst [vmem:[#allocation2] sm:$0xfe] %v46
  %52 = vst [vmem:[#allocation2 + $0x18] sm:$0xff] %v48
  %vm53 = vcmask 1046528
  %v54 = vrot.slane %v39, 1
  %v55 = vrot.slane %v40, 1
  %v56 = vsel %vm53, %v54, %v55
  %59 = vst [vmem:[#allocation2 + $0x10] sm:$0xff] %v56
  %60 = vst [vmem:[#allocation2 + $0x28] sm:$0x7f] %v55
  %61 = vst [vmem:[#allocation2] sm:$0x1] 0.0
  %62 = vst [vmem:[#allocation2 + $0x2f] sm:$0x1] 0.0
  %s63 = scalar_lea.vmem %s0, 16
  %v64 = vld [vmem:[%s63] sm:$0xff]
  %v65 = vld [vmem:[%s63 + $0x8] sm:$0xff]
  %v66 = vld [vmem:[%s1] sm:$0x1]
  %v68 = vlaneseq
  %v69 = vshrl.u32 %v68, 7
  %v70 = vsub.s32 0, %v69
  %v71 = vrot.slane %v66, %v70
  %v73 = vmul.f32 %v64, %v71
  %v74 = vmul.f32 %v65, %v71
  %v75 = vld [vmem:[%s2] sm:$0x1]
  %v77 = vlaneseq
  %v78 = vshrl.u32 %v77, 7
  %v79 = vsub.s32 0, %v78
  %v80 = vrot.slane %v75, %v79
  %v82 = vadd.f32 %v73, %v80
  %v83 = vadd.f32 %v74, %v80
  %v84 = vmax.f32 %v82, 0.0
  %v85 = vmax.f32 %v83, 0.0
  %86 = vst [vmem:[#allocation2 + $0x38] sm:$0xff] %v84
  %87 = vst [vmem:[#allocation2 + $0x50] sm:$0xff] %v85
  %v90 = vrot.slane %v84, 7
  %v91 = vrot.slane %v85, 7
  %v92 = vsel %vm45, %v90, %v91
  %95 = vst [vmem:[#allocation2 + $0x30] sm:$0xfe] %v90
  %96 = vst [vmem:[#allocation2 + $0x48] sm:$0xff] %v92
  %v97 = vrot.slane %v84, 1
  %v98 = vrot.slane %v85, 1
  %v99 = vsel %vm53, %v97, %v98
  %102 = vst [vmem:[#allocation2 + $0x40] sm:$0xff] %v99
  %103 = vst [vmem:[#allocation2 + $0x58] sm:$0x7f] %v98
  %104 = vst [vmem:[#allocation2 + $0x30] sm:$0x1] 0.0
  %105 = vst [vmem:[#allocation2 + $0x5f] sm:$0x1] 0.0
  %v106 = vld [vmem:[#allocation2] sm:$0xff]
  %v107 = vld [vmem:[#allocation2 + $0x8] sm:$0xff]
  %v108 = vld [vmem:[#allocation2 + $0x10] sm:$0xff]
  %v109 = vld [vmem:[#allocation2 + $0x18] sm:$0xff]
  %v110 = vld [vmem:[#allocation2 + $0x20] sm:$0xff]
  %v111 = vld [vmem:[#allocation2 + $0x28] sm:$0xff]
  %v112 = vld [vmem:[#allocation2 + $0x30] sm:$0xff]
  %v113 = vld [vmem:[#allocation2 + $0x38] sm:$0xff]
  %v114 = vld [vmem:[#allocation2 + $0x40] sm:$0xff]
  %v115 = vld [vmem:[#allocation2 + $0x48] sm:$0xff]
  %v116 = vld [vmem:[#allocation2 + $0x50] sm:$0xff]
  %v117 = vld [vmem:[#allocation2 + $0x58] sm:$0xff]
  %v118 = vld [vmem:[%s3] sm:$0xff]
  %v119 = vld [vmem:[%s3 + $0x8] sm:$0xff]
  %v120 = vld [vmem:[%s3 + $0x10] sm:$0xff]
  %v121 = vld [vmem:[%s3 + $0x18] sm:$0xff]
  %v122 = vld [vmem:[%s3 + $0x20] sm:$0xff]
  %v123 = vld [vmem:[%s3 + $0x28] sm:$0xff]
  %v124 = vld [vmem:[%s3 + $0x30] sm:$0xff]
  %v125 = vld [vmem:[%s3 + $0x38] sm:$0xff]
  %v126 = vld [vmem:[%s3 + $0x40] sm:$0xff]
  %v127 = vld [vmem:[%s3 + $0x48] sm:$0xff]
  %v128 = vld [vmem:[%s3 + $0x50] sm:$0xff]
  %v129 = vld [vmem:[%s3 + $0x58] sm:$0xff]
  %v130 = vld [vmem:[%s3 + $0x60] sm:$0xff]
  %v131 = vld [vmem:[%s3 + $0x68] sm:$0xff]
  %v132 = vld [vmem:[%s3 + $0x70] sm:$0xff]
  %v133 = vld [vmem:[%s3 + $0x78] sm:$0xff]
  %v134 = vld [vmem:[%s3 + $0x80] sm:$0xff]
  %v135 = vld [vmem:[%s3 + $0x88] sm:$0xff]
  %v136 = vld [vmem:[%s3 + $0x90] sm:$0xff]
  %v137 = vld [vmem:[%s3 + $0x98] sm:$0xff]
  %v138 = vld [vmem:[%s3 + $0xa0] sm:$0xff]
  %v139 = vld [vmem:[%s3 + $0xa8] sm:$0xff]
  %v140 = vld [vmem:[%s3 + $0xb0] sm:$0xff]
  %v141 = vld [vmem:[%s3 + $0xb8] sm:$0xff]
  %v142 = vld [vmem:[%s3 + $0xc0] sm:$0xff]
  %v143 = vld [vmem:[%s3 + $0xc8] sm:$0xff]
  %v144 = vld [vmem:[%s3 + $0xd0] sm:$0xff]
  %v145 = vld [vmem:[%s3 + $0xd8] sm:$0xff]
  %v146 = vld [vmem:[%s3 + $0xe0] sm:$0xff]
  %v147 = vld [vmem:[%s3 + $0xe8] sm:$0xff]
  %v148 = vld [vmem:[%s3 + $0xf0] sm:$0xff]
  %v149 = vld [vmem:[%s3 + $0xf8] sm:$0xff]
  %v150 = vld [vmem:[%s3 + $0x100] sm:$0xff]
  %v151 = vld [vmem:[%s3 + $0x108] sm:$0xff]
  %v152 = vld [vmem:[%s3 + $0x110] sm:$0xff]
  %v153 = vld [vmem:[%s3 + $0x118] sm:$0xff]
  %v154 = vld [vmem:[%s3 + $0x120] sm:$0xff]
  %v155 = vld [vmem:[%s3 + $0x128] sm:$0xff]
  %v156 = vld [vmem:[%s3 + $0x130] sm:$0xff]
  %v157 = vld [vmem:[%s3 + $0x138] sm:$0xff]
  %v158 = vld [vmem:[%s3 + $0x140] sm:$0xff]
  %v159 = vld [vmem:[%s3 + $0x148] sm:$0xff]
  %v160 = vld [vmem:[%s3 + $0x150] sm:$0xff]
  %v161 = vld [vmem:[%s3 + $0x158] sm:$0xff]
  %v162 = vld [vmem:[%s3 + $0x160] sm:$0xff]
  %v163 = vld [vmem:[%s3 + $0x168] sm:$0xff]
  %v164 = vld [vmem:[%s3 + $0x170] sm:$0xff]
  %v165 = vld [vmem:[%s3 + $0x178] sm:$0xff]
  %166 = vmatprep.subr.mxu0 0.0
  %167 = vmatpush1.msra.mxu0 %v133
  %168 = vmatprep.subr.mxu0 0.0
  %169 = vmatpush1.msra.mxu0 %v132
  %170 = vmatprep.subr.mxu0 0.0
  %171 = vmatpush1.msra.mxu0 %v131
  %172 = vmatprep.subr.mxu0 0.0
  %173 = vmatpush1.msra.mxu0 %v130
  %174 = vmatprep.subr.mxu0 0.0
  %175 = vmatpush1.msra.mxu0 %v129
  %176 = vmatprep.subr.mxu0 0.0
  %177 = vmatpush1.msra.mxu0 %v128
  %178 = vmatprep.subr.mxu0 0.0
  %179 = vmatpush1.msra.mxu0 %v127
  %180 = vmatprep.subr.mxu0 0.0
  %181 = vmatpush1.msra.mxu0 %v126
  %182 = vmatprep.subr.mxu0 0.0
  %183 = vmatpush1.msra.mxu0 %v125
  %184 = vmatprep.subr.mxu0 0.0
  %185 = vmatpush1.msra.mxu0 %v124
  %186 = vmatprep.subr.mxu0 0.0
  %187 = vmatpush1.msra.mxu0 %v123
  %188 = vmatprep.subr.mxu0 0.0
  %189 = vmatpush1.msra.mxu0 %v122
  %190 = vmatprep.subr.mxu0 0.0
  %191 = vmatpush1.msra.mxu0 %v121
  %192 = vmatprep.subr.mxu0 0.0
  %193 = vmatpush1.msra.mxu0 %v120
  %194 = vmatprep.subr.mxu0 0.0
  %195 = vmatpush1.msra.mxu0 %v119
  %196 = vmatprep.subr.mxu0 0.0
  %197 = vmatpush1.msra.mxu0 %v118
  %198 = vmatprep.subr.mxu0 0.0
  %199 = vmatpush2.msra.mxu0 %v149
  %200 = vmatprep.subr.mxu0 0.0
  %201 = vmatpush2.msra.mxu0 %v148
  %202 = vmatprep.subr.mxu0 0.0
  %203 = vmatpush2.msra.mxu0 %v147
  %204 = vmatprep.subr.mxu0 0.0
  %205 = vmatpush2.msra.mxu0 %v146
  %206 = vmatprep.subr.mxu0 0.0
  %207 = vmatpush2.msra.mxu0 %v145
  %208 = vmatprep.subr.mxu0 0.0
  %209 = vmatpush2.msra.mxu0 %v144
  %210 = vmatprep.subr.mxu0 0.0
  %211 = vmatpush2.msra.mxu0 %v143
  %212 = vmatprep.subr.mxu0 0.0
  %213 = vmatpush2.msra.mxu0 %v142
  %214 = vmatprep.subr.mxu0 0.0
  %215 = vmatpush2.msra.mxu0 %v141
  %216 = vmatprep.subr.mxu0 0.0
  %217 = vmatpush2.msra.mxu0 %v140
  %218 = vmatprep.subr.mxu0 0.0
  %219 = vmatpush2.msra.mxu0 %v139
  %220 = vmatprep.subr.mxu0 0.0
  %221 = vmatpush2.msra.mxu0 %v138
  %222 = vmatprep.subr.mxu0 0.0
  %223 = vmatpush2.msra.mxu0 %v137
  %224 = vmatprep.subr.mxu0 0.0
  %225 = vmatpush2.msra.mxu0 %v136
  %226 = vmatprep.subr.mxu0 0.0
  %227 = vmatpush2.msra.mxu0 %v135
  %228 = vmatprep.subr.mxu0 0.0
  %229 = vmatpush2.msra.mxu0 %v134
  %230 = vmatprep.mubr.f32.mxu0 %v107
  %231 = vmatmul.mubr.f32.gmra.mxu0 %v106
  %v232 = vpop.f32.mrf.mxu0
  %v233 = vadd.f32 0.0, %v232
  %v234 = vpop.f32.mrf.mxu0
  %235 = vmatprep.mubr.f32.mxu0 %v110
  %236 = vmatmul.mubr.f32.gmra.mxu0 %v109
  %v237 = vpop.f32.mrf.mxu0
  %v238 = vadd.f32 0.0, %v237
  %v239 = vpop.f32.mrf.mxu0
  %240 = vmatprep.mubr.f32.mxu0 %v113
  %241 = vmatmul.mubr.f32.gmra.mxu0 %v112
  %v242 = vpop.f32.mrf.mxu0
  %v243 = vadd.f32 0.0, %v242
  %v244 = vpop.f32.mrf.mxu0
  %245 = vmatprep.mubr.f32.mxu0 %v116
  %246 = vmatmul.mubr.f32.gmra.mxu0 %v115
  %v247 = vpop.f32.mrf.mxu0
  %v248 = vadd.f32 0.0, %v247
  %v249 = vpop.f32.mrf.mxu0
  %250 = vdwg.mxu0
  %251 = vmatprep.subr.mxu0 0.0
  %252 = vmatpush1.msra.mxu0 %v165
  %253 = vmatprep.subr.mxu0 0.0
  %254 = vmatpush1.msra.mxu0 %v164
  %255 = vmatprep.subr.mxu0 0.0
  %256 = vmatpush1.msra.mxu0 %v163
  %257 = vmatprep.subr.mxu0 0.0
  %258 = vmatpush1.msra.mxu0 %v162
  %259 = vmatprep.subr.mxu0 0.0
  %260 = vmatpush1.msra.mxu0 %v161
  %261 = vmatprep.subr.mxu0 0.0
  %262 = vmatpush1.msra.mxu0 %v160
  %263 = vmatprep.subr.mxu0 0.0
  %264 = vmatpush1.msra.mxu0 %v159
  %265 = vmatprep.subr.mxu0 0.0
  %266 = vmatpush1.msra.mxu0 %v158
  %267 = vmatprep.subr.mxu0 0.0
  %268 = vmatpush1.msra.mxu0 %v157
  %269 = vmatprep.subr.mxu0 0.0
  %270 = vmatpush1.msra.mxu0 %v156
  %271 = vmatprep.subr.mxu0 0.0
  %272 = vmatpush1.msra.mxu0 %v155
  %273 = vmatprep.subr.mxu0 0.0
  %274 = vmatpush1.msra.mxu0 %v154
  %275 = vmatprep.subr.mxu0 0.0
  %276 = vmatpush1.msra.mxu0 %v153
  %277 = vmatprep.subr.mxu0 0.0
  %278 = vmatpush1.msra.mxu0 %v152
  %279 = vmatprep.subr.mxu0 0.0
  %280 = vmatpush1.msra.mxu0 %v151
  %281 = vmatprep.subr.mxu0 0.0
  %282 = vmatpush1.msra.mxu0 %v150
  %283 = vmatprep.subr.mxu0 0.0
  %284 = vmatpush2.msra.mxu0 0.0
  %285 = vmatprep.subr.mxu0 0.0
  %286 = vmatpush2.msra.mxu0 0.0
  %287 = vmatprep.subr.mxu0 0.0
  %288 = vmatpush2.msra.mxu0 0.0
  %289 = vmatprep.subr.mxu0 0.0
  %290 = vmatpush2.msra.mxu0 0.0
  %291 = vmatprep.subr.mxu0 0.0
  %292 = vmatpush2.msra.mxu0 0.0
  %293 = vmatprep.subr.mxu0 0.0
  %294 = vmatpush2.msra.mxu0 0.0
  %295 = vmatprep.subr.mxu0 0.0
  %296 = vmatpush2.msra.mxu0 0.0
  %297 = vmatprep.subr.mxu0 0.0
  %298 = vmatpush2.msra.mxu0 0.0
  %299 = vmatprep.subr.mxu0 0.0
  %300 = vmatpush2.msra.mxu0 0.0
  %301 = vmatprep.subr.mxu0 0.0
  %302 = vmatpush2.msra.mxu0 0.0
  %303 = vmatprep.subr.mxu0 0.0
  %304 = vmatpush2.msra.mxu0 0.0
  %305 = vmatprep.subr.mxu0 0.0
  %306 = vmatpush2.msra.mxu0 0.0
  %307 = vmatprep.subr.mxu0 0.0
  %308 = vmatpush2.msra.mxu0 0.0
  %309 = vmatprep.subr.mxu0 0.0
  %310 = vmatpush2.msra.mxu0 0.0
  %311 = vmatprep.subr.mxu0 0.0
  %312 = vmatpush2.msra.mxu0 0.0
  %313 = vmatprep.subr.mxu0 0.0
  %314 = vmatpush2.msra.mxu0 0.0
  %315 = vmatprep.mubr.f32.mxu0 0.0
  %316 = vmatmul.mubr.f32.gmra.mxu0 %v108
  %v317 = vpop.f32.mrf.mxu0
  %v318 = vadd.f32 %v233, %v317
  %v319 = vpop.f32.mrf.mxu0
  %320 = vmatprep.mubr.f32.mxu0 0.0
  %321 = vmatmul.mubr.f32.gmra.mxu0 %v111
  %v322 = vpop.f32.mrf.mxu0
  %v323 = vadd.f32 %v238, %v322
  %v324 = vpop.f32.mrf.mxu0
  %325 = vmatprep.mubr.f32.mxu0 0.0
  %326 = vmatmul.mubr.f32.gmra.mxu0 %v114
  %v327 = vpop.f32.mrf.mxu0
  %v328 = vadd.f32 %v243, %v327
  %v329 = vpop.f32.mrf.mxu0
  %330 = vmatprep.mubr.f32.mxu0 0.0
  %331 = vmatmul.mubr.f32.gmra.mxu0 %v117
  %v332 = vpop.f32.mrf.mxu0
  %v333 = vadd.f32 %v248, %v332
  %v334 = vpop.f32.mrf.mxu0
  %335 = vdwg.mxu0
  %336 = vst [vmem:[%s4] sm:$0xff] %v318
  %337 = vst [vmem:[%s4 + $0x8] sm:$0xff] %v323
  %s338 = scalar_lea.vmem %s4, 16
  %339 = vst [vmem:[%s338] sm:$0xff] %v328
  %340 = vst [vmem:[%s338 + $0x8] sm:$0xff] %v333
  %v341 = vadd.f32 %v318, %v323
  %v342 = vadd.f32 %v341, %v328
  %v343 = vadd.f32 %v342, %v333
  %v344 = vrot.slane %v343, 4
  %v345 = vadd.f32 %v343, %v344
  %v346 = vrot.slane %v345, 2
  %v347 = vadd.f32 %v345, %v346
  %v348 = vrot.slane %v347, 1
  %v349 = vadd.f32 %v347, %v348
  %v350 = vmul.f32 %v318, %v318
  %v351 = vmul.f32 %v323, %v323
  %v352 = vmul.f32 %v328, %v328
  %v353 = vmul.f32 %v333, %v333
  %v354 = vadd.f32 %v350, %v351
  %v355 = vadd.f32 %v354, %v352
  %v356 = vadd.f32 %v355, %v353
  %v357 = vrot.slane %v356, 4
  %v358 = vadd.f32 %v356, %v357
  %v359 = vrot.slane %v358, 2
  %v360 = vadd.f32 %v358, %v359
  %v361 = vrot.slane %v360, 1
  %v362 = vadd.f32 %v360, %v361
  %v363 = vsel %vm45, %v349, %v362
  %364 = vst [vmem:[%s5] sm:$0x3] %v363
  // Predicated region
  $region18: #{double_conv2d.4} parent=0 // pred_check
    _
  $region19: #{double_conv2d.4} parent=0 // pred_check_branch
    %366 = sbr.rel (0) target = $region21
  $region20: #{double_conv2d.4} parent=0 // pred_region
    _
  $region21: #{double_conv2d.4} parent=0 // pred_fallthru
    _
  // Predicated region
  $region22: #{double_conv2d.4} parent=0 // pred_check
    _
  $region23: #{double_conv2d.4} parent=0 // pred_check_branch
    %368 = sbr.rel (0) target = $region25
  $region24: #{double_conv2d.4} parent=0 // pred_region
    _
  $region25: #{double_conv2d.4} parent=0 // pred_fallthru
    _
  // Predicated region
  $region26: #{double_conv2d.4} parent=0 // pred_check
    _
  $region27: #{double_conv2d.4} parent=0 // pred_check_branch
    %370 = sbr.rel (0) target = $region29
  $region28: #{double_conv2d.4} parent=0 // pred_region
    _
  $region29: #{double_conv2d.4} parent=0 // pred_fallthru
    _
  // Predicated region
  $region30: #{double_conv2d.4} parent=0 // pred_check
    _
  $region31: #{double_conv2d.4} parent=0 // pred_check_branch
    %372 = sbr.rel (0) target = $region33
  $region32: #{double_conv2d.4} parent=0 // pred_region
    _
  $region33: #{double_conv2d.4} parent=0 // pred_fallthru
    _

</llo_original>
